<compile_context>
chip_gen: v7x
topology: tpu7x:2x2x1
jax: 0.10.0
libtpu: 0.0.40
codegen_flags: <defaults>
</compile_context>

<pallas_src>
import functools
import math

import jax
import jax.numpy as jnp
import numpy as np
from jax.experimental import pallas as pl
from jax.experimental.pallas import tpu as pltpu


def _pool_conv_lrelu_kernel(x_ref, w_ref, o_ref, *, KH, KW, W, Ho, Wo, ph, pw,
                            negative_slope, activation, compute_dtype):
    # x_ref: (bN, Cin, Ho, 2*W)  row y holds [raw row 2y | raw row 2y+1]
    # w_ref: (Cout, KH*KW*Cin)   conv weight, K ordered (kh, kw, ci), bf16
    # o_ref: (bN, Cout, Ho*Wo)   lane-dense output block
    bN, Cin = x_ref.shape[0], x_ref.shape[1]
    M = Ho * Wo

    # ---- fused 2x2 max-pool (feedback #1) ----------------------------------
    xr = x_ref[...].astype(compute_dtype)               # cast once (feedback #6)
    hm = jnp.maximum(xr[..., :W], xr[..., W:])          # H-pair max (bN,Cin,Ho,W)
    pm = jnp.maximum(hm[..., :W - 1], hm[..., 1:])      # adjacent-col max

    # Compact the even columns of pm with a constant 0/1 selection matmul.
    # Exact (one 1.0 term per output column) and keeps all slices unit-stride.
    r = jax.lax.broadcasted_iota(jnp.int32, (W - 1, Wo), 0)
    c = jax.lax.broadcasted_iota(jnp.int32, (W - 1, Wo), 1)
    sel = (r == 2 * c).astype(compute_dtype)
    pooled = jnp.dot(pm.reshape(bN * Cin * Ho, W - 1), sel,
                     preferred_element_type=jnp.float32)
    pooled = pooled.astype(compute_dtype).reshape(bN, Cin, Ho, Wo)

    # ---- W zero-padding for the 'same' conv (stays in vregs, feedback #7) --
    if pw > 0:
        zc = jnp.zeros((bN, Cin, Ho, pw), compute_dtype)
        wpad = jnp.concatenate([zc, pooled, zc], axis=-1)     # (bN,Cin,Ho,Wp)
    else:
        wpad = pooled
    zrow = jnp.zeros((Cin, Wo), compute_dtype)

    # ---- exact-width im2col assembled in vregs (feedback #3, #7) -----------
    # patch rows: K = (kh, kw, ci); patch cols: b*M + y*Wo + x.
    slabs = []
    for t in range(KH * KW):
        kh, kw = divmod(t, KW)
        pieces = []
        for b in range(bN):
            for y in range(Ho):
                yr = y + kh - ph
                if 0 <= yr < Ho:
                    pieces.append(wpad[b, :, yr, kw:kw + Wo])   # (Cin, Wo)
                else:
                    pieces.append(zrow)                         # H halo -> zeros
        slabs.append(jnp.concatenate(pieces, axis=1))           # (Cin, bN*M)
    patch = jnp.concatenate(slabs, axis=0)                      # (KH*KW*Cin, bN*M)

    # ---- ONE MXU matmul for the whole bN block (feedback #2, #6) -----------
    acc = jnp.dot(w_ref[...], patch,
                  preferred_element_type=jnp.float32)           # (Cout, bN*M)

    if activation:                                              # LeakyReLU
        acc = jnp.where(acc >= 0, acc, negative_slope * acc)

    # ---- lane-dense stores: one contiguous (Cout, Ho*Wo) slab per image ----
    for b in range(bN):
        o_ref[b] = acc[:, b * M:(b + 1) * M].astype(o_ref.dtype)


def downsample_maxpool_conv2d(x_nchw, w_hwio, *, negative_slope=0.2,
                              activation=True, batch_block=None,
                              compute_dtype=jnp.bfloat16):
    N, C, H, W = x_nchw.shape
    KH, KW, Cin, Cout = w_hwio.shape
    assert C == Cin, "channel mismatch"
    assert H % 2 == 0 and W % 2 == 0, "MaxPool2d(2) expects even H, W"
    assert KH % 2 == 1 and KW % 2 == 1, "'same' conv requires odd kernel size"
    Ho, Wo = H // 2, W // 2
    ph, pw = KH // 2, KW // 2

    # Keep >= 2 grid steps so both v7x TensorCores get work (feedback #5).
    if batch_block is None:
        cands = [b for b in (8, 4, 2, 1) if N % b == 0 and (N // b) >= 2]
        batch_block = cands[0] if cands else 1
    bN = batch_block
    assert N % bN == 0

    # FREE reshape: fold each raw row pair (2y, 2y+1) into one 2W-wide row, so
    # the in-kernel H-pool is a contiguous lane-slice max (no strided access).
    x_folded = x_nchw.reshape(N, Cin, Ho, 2 * W)

    # Conv weight -> single matmul operand (Cout, KH*KW*Cin), bf16 (feedback #6).
    w_mat = jnp.transpose(w_hwio, (3, 0, 1, 2)).reshape(
        Cout, KH * KW * Cin).astype(compute_dtype)

    kernel = functools.partial(
        _pool_conv_lrelu_kernel, KH=KH, KW=KW, W=W, Ho=Ho, Wo=Wo, ph=ph, pw=pw,
        negative_slope=negative_slope, activation=activation,
        compute_dtype=compute_dtype)

    out_flat = pl.pallas_call(
        kernel,
        out_shape=jax.ShapeDtypeStruct((N, Cout, Ho * Wo), x_nchw.dtype),
        grid_spec=pltpu.PrefetchScalarGridSpec(
            num_scalar_prefetch=0,
            grid=(N // bN,),
            in_specs=[
                pl.BlockSpec((bN, Cin, Ho, 2 * W), lambda n: (n, 0, 0, 0)),
                pl.BlockSpec((Cout, KH * KW * Cin), lambda n: (0, 0)),
            ],
            out_specs=pl.BlockSpec((bN, Cout, Ho * Wo), lambda n: (n, 0, 0)),
        ),
        compiler_params=pltpu.CompilerParams(
            dimension_semantics=("parallel",),
            vmem_limit_bytes=64 * 1024 * 1024),
    )(x_folded, w_mat)

    # Free reshape back to PyTorch's NCHW output convention.
    return out_flat.reshape(N, Cout, Ho, Wo)


def init_conv_weight(key, in_channels, out_channels, kernel_size,
                     negative_slope):
    # Matches torch.nn.init.kaiming_uniform_(w, a=negative_slope,
    # nonlinearity='leaky_relu') distribution (deterministic via PRNGKey).
    fan_in = in_channels * kernel_size * kernel_size
    gain = math.sqrt(2.0 / (1.0 + negative_slope ** 2))
    bound = gain * math.sqrt(3.0 / fan_in)
    return jax.random.uniform(
        key, (kernel_size, kernel_size, in_channels, out_channels),
        jnp.float32, -bound, bound)


if __name__ == "__main__":
    key = jax.random.PRNGKey(0)
    kx, kw = jax.random.split(key)

    N, Cin, H, W = 4, 4, 16, 16
    Cout, K = 8, 3
    neg_slope = 0.2

    x = jax.random.normal(kx, (N, Cin, H, W), jnp.float32)
    w = init_conv_weight(kw, Cin, Cout, K, neg_slope)

    out = downsample_maxpool_conv2d(x, w, negative_slope=neg_slope,
                                    activation=True)
    out = jax.block_until_ready(out)

    # Pure-JAX reference with identical operand precision (bf16 conv operands,
    # f32 accumulation) so only accumulation order differs from the kernel.
    pooled_ref = jnp.max(x.reshape(N, Cin, H // 2, 2, W // 2, 2), axis=(3, 5))
    ref = jax.lax.conv_general_dilated(
        pooled_ref.astype(jnp.bfloat16), w.astype(jnp.bfloat16), (1, 1), "SAME",
        dimension_numbers=("NCHW", "HWIO", "NCHW"),
        preferred_element_type=jnp.float32)
    ref = jnp.where(ref >= 0, ref, neg_slope * ref).astype(x.dtype)

    assert out.shape == (N, Cout, H // 2, W // 2)
    np.testing.assert_allclose(np.asarray(out), np.asarray(ref),
                               rtol=5e-3, atol=5e-3)
    print("KERNEL_OK")
</pallas_src>

<mosaic_0001>
module attributes {stable_mosaic.version = 11 : i64} {
  func.func @_pool_conv_lrelu_kernel(%arg0: i32, %arg1: memref<2x4x8x32xf32, #tpu.memory_space<vmem>>, %arg2: memref<8x36xbf16, #tpu.memory_space<vmem>>, %arg3: memref<2x8x64xf32, #tpu.memory_space<vmem>>) attributes {dimension_semantics = [#tpu.dimension_semantics<parallel>], iteration_bounds = array<i64: 2>, scalar_prefetch = 0 : i64, scratch_operands = 0 : i64, tpu.core_type = #tpu.core_type<tc>, window_params = [{transform_indices = @transform_0, window_bounds = array<i64: 2, 4, 8, 32>}, {pipeline_mode = #tpu.pipeline_mode<synchronous>, transform_indices = @transform_1, window_bounds = array<i64: 8, 36>}, {transform_indices = @transform_2, window_bounds = array<i64: 2, 8, 64>}]} {
    %c0 = arith.constant 0 : index
    %c0_0 = arith.constant 0 : index
    %c0_1 = arith.constant 0 : index
    %c0_2 = arith.constant 0 : index
    %0 = vector.load %arg1[%c0, %c0_0, %c0_1, %c0_2] : memref<2x4x8x32xf32, #tpu.memory_space<vmem>>, vector<2x4x8x32xf32>
    %1 = arith.truncf %0 : vector<2x4x8x32xf32> to vector<2x4x8x32xbf16>
    %2 = vector.extract_strided_slice %1 {offsets = [0, 0, 0, 0], sizes = [2, 4, 8, 16], strides = [1, 1, 1, 1]} : vector<2x4x8x32xbf16> to vector<2x4x8x16xbf16>
    %3 = vector.extract_strided_slice %1 {offsets = [0, 0, 0, 16], sizes = [2, 4, 8, 16], strides = [1, 1, 1, 1]} : vector<2x4x8x32xbf16> to vector<2x4x8x16xbf16>
    %4 = arith.maximumf %2, %3 : vector<2x4x8x16xbf16>
    %5 = vector.extract_strided_slice %4 {offsets = [0, 0, 0, 0], sizes = [2, 4, 8, 15], strides = [1, 1, 1, 1]} : vector<2x4x8x16xbf16> to vector<2x4x8x15xbf16>
    %6 = vector.extract_strided_slice %4 {offsets = [0, 0, 0, 1], sizes = [2, 4, 8, 15], strides = [1, 1, 1, 1]} : vector<2x4x8x16xbf16> to vector<2x4x8x15xbf16>
    %7 = arith.maximumf %5, %6 : vector<2x4x8x15xbf16>
    %8 = tpu.iota {dimensions = array<i32: 0>} : vector<15x8xi32>
    %9 = tpu.iota {dimensions = array<i32: 1>} : vector<15x8xi32>
    %c2_i32 = arith.constant 2 : i32
    %10 = vector.broadcast %c2_i32 : i32 to vector<15x8xi32>
    %11 = arith.muli %10, %9 : vector<15x8xi32>
    %12 = arith.cmpi eq, %8, %11 : vector<15x8xi32>
    %13 = arith.extui %12 : vector<15x8xi1> to vector<15x8xi32>
    %14 = arith.sitofp %13 : vector<15x8xi32> to vector<15x8xf32>
    %15 = arith.truncf %14 : vector<15x8xf32> to vector<15x8xbf16>
    %16 = vector.shape_cast %7 : vector<2x4x8x15xbf16> to vector<64x15xbf16>
    %cst = arith.constant dense<0.000000e+00> : vector<64x8xf32>
    %17 = tpu.matmul %16, %15, %cst {dimension_numbers = #tpu.dot_dimension_numbers<[1], [0], [0], [1], [0, 0, 1, 1], [], []>} : vector<64x15xbf16>, vector<15x8xbf16>, vector<64x8xf32> -> vector<64x8xf32>
    %18 = arith.truncf %17 : vector<64x8xf32> to vector<64x8xbf16>
    %19 = vector.shape_cast %18 : vector<64x8xbf16> to vector<2x4x8x8xbf16>
    %cst_3 = arith.constant 0.000000e+00 : bf16
    %20 = vector.broadcast %cst_3 : bf16 to vector<2x4x8x1xbf16>
    %21 = tpu.concatenate %20, %19, %20 in 3 : vector<2x4x8x1xbf16>, vector<2x4x8x8xbf16>, vector<2x4x8x1xbf16> -> vector<2x4x8x10xbf16>
    %cst_4 = arith.constant 0.000000e+00 : bf16
    %22 = vector.broadcast %cst_4 : bf16 to vector<4x8xbf16>
    %23 = vector.extract_strided_slice %21 {offsets = [0, 0, 0, 0], sizes = [1, 4, 1, 8], strides = [1, 1, 1, 1]} : vector<2x4x8x10xbf16> to vector<1x4x1x8xbf16>
    %24 = vector.shape_cast %23 : vector<1x4x1x8xbf16> to vector<4x8xbf16>
    %25 = vector.extract_strided_slice %21 {offsets = [0, 0, 1, 0], sizes = [1, 4, 1, 8], strides = [1, 1, 1, 1]} : vector<2x4x8x10xbf16> to vector<1x4x1x8xbf16>
    %26 = vector.shape_cast %25 : vector<1x4x1x8xbf16> to vector<4x8xbf16>
    %27 = vector.extract_strided_slice %21 {offsets = [0, 0, 2, 0], sizes = [1, 4, 1, 8], strides = [1, 1, 1, 1]} : vector<2x4x8x10xbf16> to vector<1x4x1x8xbf16>
    %28 = vector.shape_cast %27 : vector<1x4x1x8xbf16> to vector<4x8xbf16>
    %29 = vector.extract_strided_slice %21 {offsets = [0, 0, 3, 0], sizes = [1, 4, 1, 8], strides = [1, 1, 1, 1]} : vector<2x4x8x10xbf16> to vector<1x4x1x8xbf16>
    %30 = vector.shape_cast %29 : vector<1x4x1x8xbf16> to vector<4x8xbf16>
    %31 = vector.extract_strided_slice %21 {offsets = [0, 0, 4, 0], sizes = [1, 4, 1, 8], strides = [1, 1, 1, 1]} : vector<2x4x8x10xbf16> to vector<1x4x1x8xbf16>
    %32 = vector.shape_cast %31 : vector<1x4x1x8xbf16> to vector<4x8xbf16>
    %33 = vector.extract_strided_slice %21 {offsets = [0, 0, 5, 0], sizes = [1, 4, 1, 8], strides = [1, 1, 1, 1]} : vector<2x4x8x10xbf16> to vector<1x4x1x8xbf16>
    %34 = vector.shape_cast %33 : vector<1x4x1x8xbf16> to vector<4x8xbf16>
    %35 = vector.extract_strided_slice %21 {offsets = [0, 0, 6, 0], sizes = [1, 4, 1, 8], strides = [1, 1, 1, 1]} : vector<2x4x8x10xbf16> to vector<1x4x1x8xbf16>
    %36 = vector.shape_cast %35 : vector<1x4x1x8xbf16> to vector<4x8xbf16>
    %37 = vector.extract_strided_slice %21 {offsets = [1, 0, 0, 0], sizes = [1, 4, 1, 8], strides = [1, 1, 1, 1]} : vector<2x4x8x10xbf16> to vector<1x4x1x8xbf16>
    %38 = vector.shape_cast %37 : vector<1x4x1x8xbf16> to vector<4x8xbf16>
    %39 = vector.extract_strided_slice %21 {offsets = [1, 0, 1, 0], sizes = [1, 4, 1, 8], strides = [1, 1, 1, 1]} : vector<2x4x8x10xbf16> to vector<1x4x1x8xbf16>
    %40 = vector.shape_cast %39 : vector<1x4x1x8xbf16> to vector<4x8xbf16>
    %41 = vector.extract_strided_slice %21 {offsets = [1, 0, 2, 0], sizes = [1, 4, 1, 8], strides = [1, 1, 1, 1]} : vector<2x4x8x10xbf16> to vector<1x4x1x8xbf16>
    %42 = vector.shape_cast %41 : vector<1x4x1x8xbf16> to vector<4x8xbf16>
    %43 = vector.extract_strided_slice %21 {offsets = [1, 0, 3, 0], sizes = [1, 4, 1, 8], strides = [1, 1, 1, 1]} : vector<2x4x8x10xbf16> to vector<1x4x1x8xbf16>
    %44 = vector.shape_cast %43 : vector<1x4x1x8xbf16> to vector<4x8xbf16>
    %45 = vector.extract_strided_slice %21 {offsets = [1, 0, 4, 0], sizes = [1, 4, 1, 8], strides = [1, 1, 1, 1]} : vector<2x4x8x10xbf16> to vector<1x4x1x8xbf16>
    %46 = vector.shape_cast %45 : vector<1x4x1x8xbf16> to vector<4x8xbf16>
    %47 = vector.extract_strided_slice %21 {offsets = [1, 0, 5, 0], sizes = [1, 4, 1, 8], strides = [1, 1, 1, 1]} : vector<2x4x8x10xbf16> to vector<1x4x1x8xbf16>
    %48 = vector.shape_cast %47 : vector<1x4x1x8xbf16> to vector<4x8xbf16>
    %49 = vector.extract_strided_slice %21 {offsets = [1, 0, 6, 0], sizes = [1, 4, 1, 8], strides = [1, 1, 1, 1]} : vector<2x4x8x10xbf16> to vector<1x4x1x8xbf16>
    %50 = vector.shape_cast %49 : vector<1x4x1x8xbf16> to vector<4x8xbf16>
    %51 = tpu.concatenate %22, %24, %26, %28, %30, %32, %34, %36, %22, %38, %40, %42, %44, %46, %48, %50 in 1 : vector<4x8xbf16>, vector<4x8xbf16>, vector<4x8xbf16>, vector<4x8xbf16>, vector<4x8xbf16>, vector<4x8xbf16>, vector<4x8xbf16>, vector<4x8xbf16>, vector<4x8xbf16>, vector<4x8xbf16>, vector<4x8xbf16>, vector<4x8xbf16>, vector<4x8xbf16>, vector<4x8xbf16>, vector<4x8xbf16>, vector<4x8xbf16> -> vector<4x128xbf16>
    %52 = vector.extract_strided_slice %21 {offsets = [0, 0, 0, 1], sizes = [1, 4, 1, 8], strides = [1, 1, 1, 1]} : vector<2x4x8x10xbf16> to vector<1x4x1x8xbf16>
    %53 = vector.shape_cast %52 : vector<1x4x1x8xbf16> to vector<4x8xbf16>
    %54 = vector.extract_strided_slice %21 {offsets = [0, 0, 1, 1], sizes = [1, 4, 1, 8], strides = [1, 1, 1, 1]} : vector<2x4x8x10xbf16> to vector<1x4x1x8xbf16>
    %55 = vector.shape_cast %54 : vector<1x4x1x8xbf16> to vector<4x8xbf16>
    %56 = vector.extract_strided_slice %21 {offsets = [0, 0, 2, 1], sizes = [1, 4, 1, 8], strides = [1, 1, 1, 1]} : vector<2x4x8x10xbf16> to vector<1x4x1x8xbf16>
    %57 = vector.shape_cast %56 : vector<1x4x1x8xbf16> to vector<4x8xbf16>
    %58 = vector.extract_strided_slice %21 {offsets = [0, 0, 3, 1], sizes = [1, 4, 1, 8], strides = [1, 1, 1, 1]} : vector<2x4x8x10xbf16> to vector<1x4x1x8xbf16>
    %59 = vector.shape_cast %58 : vector<1x4x1x8xbf16> to vector<4x8xbf16>
    %60 = vector.extract_strided_slice %21 {offsets = [0, 0, 4, 1], sizes = [1, 4, 1, 8], strides = [1, 1, 1, 1]} : vector<2x4x8x10xbf16> to vector<1x4x1x8xbf16>
    %61 = vector.shape_cast %60 : vector<1x4x1x8xbf16> to vector<4x8xbf16>
    %62 = vector.extract_strided_slice %21 {offsets = [0, 0, 5, 1], sizes = [1, 4, 1, 8], strides = [1, 1, 1, 1]} : vector<2x4x8x10xbf16> to vector<1x4x1x8xbf16>
    %63 = vector.shape_cast %62 : vector<1x4x1x8xbf16> to vector<4x8xbf16>
    %64 = vector.extract_strided_slice %21 {offsets = [0, 0, 6, 1], sizes = [1, 4, 1, 8], strides = [1, 1, 1, 1]} : vector<2x4x8x10xbf16> to vector<1x4x1x8xbf16>
    %65 = vector.shape_cast %64 : vector<1x4x1x8xbf16> to vector<4x8xbf16>
    %66 = vector.extract_strided_slice %21 {offsets = [1, 0, 0, 1], sizes = [1, 4, 1, 8], strides = [1, 1, 1, 1]} : vector<2x4x8x10xbf16> to vector<1x4x1x8xbf16>
    %67 = vector.shape_cast %66 : vector<1x4x1x8xbf16> to vector<4x8xbf16>
    %68 = vector.extract_strided_slice %21 {offsets = [1, 0, 1, 1], sizes = [1, 4, 1, 8], strides = [1, 1, 1, 1]} : vector<2x4x8x10xbf16> to vector<1x4x1x8xbf16>
    %69 = vector.shape_cast %68 : vector<1x4x1x8xbf16> to vector<4x8xbf16>
    %70 = vector.extract_strided_slice %21 {offsets = [1, 0, 2, 1], sizes = [1, 4, 1, 8], strides = [1, 1, 1, 1]} : vector<2x4x8x10xbf16> to vector<1x4x1x8xbf16>
    %71 = vector.shape_cast %70 : vector<1x4x1x8xbf16> to vector<4x8xbf16>
    %72 = vector.extract_strided_slice %21 {offsets = [1, 0, 3, 1], sizes = [1, 4, 1, 8], strides = [1, 1, 1, 1]} : vector<2x4x8x10xbf16> to vector<1x4x1x8xbf16>
    %73 = vector.shape_cast %72 : vector<1x4x1x8xbf16> to vector<4x8xbf16>
    %74 = vector.extract_strided_slice %21 {offsets = [1, 0, 4, 1], sizes = [1, 4, 1, 8], strides = [1, 1, 1, 1]} : vector<2x4x8x10xbf16> to vector<1x4x1x8xbf16>
    %75 = vector.shape_cast %74 : vector<1x4x1x8xbf16> to vector<4x8xbf16>
    %76 = vector.extract_strided_slice %21 {offsets = [1, 0, 5, 1], sizes = [1, 4, 1, 8], strides = [1, 1, 1, 1]} : vector<2x4x8x10xbf16> to vector<1x4x1x8xbf16>
    %77 = vector.shape_cast %76 : vector<1x4x1x8xbf16> to vector<4x8xbf16>
    %78 = vector.extract_strided_slice %21 {offsets = [1, 0, 6, 1], sizes = [1, 4, 1, 8], strides = [1, 1, 1, 1]} : vector<2x4x8x10xbf16> to vector<1x4x1x8xbf16>
    %79 = vector.shape_cast %78 : vector<1x4x1x8xbf16> to vector<4x8xbf16>
    %80 = tpu.concatenate %22, %53, %55, %57, %59, %61, %63, %65, %22, %67, %69, %71, %73, %75, %77, %79 in 1 : vector<4x8xbf16>, vector<4x8xbf16>, vector<4x8xbf16>, vector<4x8xbf16>, vector<4x8xbf16>, vector<4x8xbf16>, vector<4x8xbf16>, vector<4x8xbf16>, vector<4x8xbf16>, vector<4x8xbf16>, vector<4x8xbf16>, vector<4x8xbf16>, vector<4x8xbf16>, vector<4x8xbf16>, vector<4x8xbf16>, vector<4x8xbf16> -> vector<4x128xbf16>
    %81 = vector.extract_strided_slice %21 {offsets = [0, 0, 0, 2], sizes = [1, 4, 1, 8], strides = [1, 1, 1, 1]} : vector<2x4x8x10xbf16> to vector<1x4x1x8xbf16>
    %82 = vector.shape_cast %81 : vector<1x4x1x8xbf16> to vector<4x8xbf16>
    %83 = vector.extract_strided_slice %21 {offsets = [0, 0, 1, 2], sizes = [1, 4, 1, 8], strides = [1, 1, 1, 1]} : vector<2x4x8x10xbf16> to vector<1x4x1x8xbf16>
    %84 = vector.shape_cast %83 : vector<1x4x1x8xbf16> to vector<4x8xbf16>
    %85 = vector.extract_strided_slice %21 {offsets = [0, 0, 2, 2], sizes = [1, 4, 1, 8], strides = [1, 1, 1, 1]} : vector<2x4x8x10xbf16> to vector<1x4x1x8xbf16>
    %86 = vector.shape_cast %85 : vector<1x4x1x8xbf16> to vector<4x8xbf16>
    %87 = vector.extract_strided_slice %21 {offsets = [0, 0, 3, 2], sizes = [1, 4, 1, 8], strides = [1, 1, 1, 1]} : vector<2x4x8x10xbf16> to vector<1x4x1x8xbf16>
    %88 = vector.shape_cast %87 : vector<1x4x1x8xbf16> to vector<4x8xbf16>
    %89 = vector.extract_strided_slice %21 {offsets = [0, 0, 4, 2], sizes = [1, 4, 1, 8], strides = [1, 1, 1, 1]} : vector<2x4x8x10xbf16> to vector<1x4x1x8xbf16>
    %90 = vector.shape_cast %89 : vector<1x4x1x8xbf16> to vector<4x8xbf16>
    %91 = vector.extract_strided_slice %21 {offsets = [0, 0, 5, 2], sizes = [1, 4, 1, 8], strides = [1, 1, 1, 1]} : vector<2x4x8x10xbf16> to vector<1x4x1x8xbf16>
    %92 = vector.shape_cast %91 : vector<1x4x1x8xbf16> to vector<4x8xbf16>
    %93 = vector.extract_strided_slice %21 {offsets = [0, 0, 6, 2], sizes = [1, 4, 1, 8], strides = [1, 1, 1, 1]} : vector<2x4x8x10xbf16> to vector<1x4x1x8xbf16>
    %94 = vector.shape_cast %93 : vector<1x4x1x8xbf16> to vector<4x8xbf16>
    %95 = vector.extract_strided_slice %21 {offsets = [1, 0, 0, 2], sizes = [1, 4, 1, 8], strides = [1, 1, 1, 1]} : vector<2x4x8x10xbf16> to vector<1x4x1x8xbf16>
    %96 = vector.shape_cast %95 : vector<1x4x1x8xbf16> to vector<4x8xbf16>
    %97 = vector.extract_strided_slice %21 {offsets = [1, 0, 1, 2], sizes = [1, 4, 1, 8], strides = [1, 1, 1, 1]} : vector<2x4x8x10xbf16> to vector<1x4x1x8xbf16>
    %98 = vector.shape_cast %97 : vector<1x4x1x8xbf16> to vector<4x8xbf16>
    %99 = vector.extract_strided_slice %21 {offsets = [1, 0, 2, 2], sizes = [1, 4, 1, 8], strides = [1, 1, 1, 1]} : vector<2x4x8x10xbf16> to vector<1x4x1x8xbf16>
    %100 = vector.shape_cast %99 : vector<1x4x1x8xbf16> to vector<4x8xbf16>
    %101 = vector.extract_strided_slice %21 {offsets = [1, 0, 3, 2], sizes = [1, 4, 1, 8], strides = [1, 1, 1, 1]} : vector<2x4x8x10xbf16> to vector<1x4x1x8xbf16>
    %102 = vector.shape_cast %101 : vector<1x4x1x8xbf16> to vector<4x8xbf16>
    %103 = vector.extract_strided_slice %21 {offsets = [1, 0, 4, 2], sizes = [1, 4, 1, 8], strides = [1, 1, 1, 1]} : vector<2x4x8x10xbf16> to vector<1x4x1x8xbf16>
    %104 = vector.shape_cast %103 : vector<1x4x1x8xbf16> to vector<4x8xbf16>
    %105 = vector.extract_strided_slice %21 {offsets = [1, 0, 5, 2], sizes = [1, 4, 1, 8], strides = [1, 1, 1, 1]} : vector<2x4x8x10xbf16> to vector<1x4x1x8xbf16>
    %106 = vector.shape_cast %105 : vector<1x4x1x8xbf16> to vector<4x8xbf16>
    %107 = vector.extract_strided_slice %21 {offsets = [1, 0, 6, 2], sizes = [1, 4, 1, 8], strides = [1, 1, 1, 1]} : vector<2x4x8x10xbf16> to vector<1x4x1x8xbf16>
    %108 = vector.shape_cast %107 : vector<1x4x1x8xbf16> to vector<4x8xbf16>
    %109 = tpu.concatenate %22, %82, %84, %86, %88, %90, %92, %94, %22, %96, %98, %100, %102, %104, %106, %108 in 1 : vector<4x8xbf16>, vector<4x8xbf16>, vector<4x8xbf16>, vector<4x8xbf16>, vector<4x8xbf16>, vector<4x8xbf16>, vector<4x8xbf16>, vector<4x8xbf16>, vector<4x8xbf16>, vector<4x8xbf16>, vector<4x8xbf16>, vector<4x8xbf16>, vector<4x8xbf16>, vector<4x8xbf16>, vector<4x8xbf16>, vector<4x8xbf16> -> vector<4x128xbf16>
    %110 = vector.extract_strided_slice %21 {offsets = [0, 0, 0, 0], sizes = [1, 4, 1, 8], strides = [1, 1, 1, 1]} : vector<2x4x8x10xbf16> to vector<1x4x1x8xbf16>
    %111 = vector.shape_cast %110 : vector<1x4x1x8xbf16> to vector<4x8xbf16>
    %112 = vector.extract_strided_slice %21 {offsets = [0, 0, 1, 0], sizes = [1, 4, 1, 8], strides = [1, 1, 1, 1]} : vector<2x4x8x10xbf16> to vector<1x4x1x8xbf16>
    %113 = vector.shape_cast %112 : vector<1x4x1x8xbf16> to vector<4x8xbf16>
    %114 = vector.extract_strided_slice %21 {offsets = [0, 0, 2, 0], sizes = [1, 4, 1, 8], strides = [1, 1, 1, 1]} : vector<2x4x8x10xbf16> to vector<1x4x1x8xbf16>
    %115 = vector.shape_cast %114 : vector<1x4x1x8xbf16> to vector<4x8xbf16>
    %116 = vector.extract_strided_slice %21 {offsets = [0, 0, 3, 0], sizes = [1, 4, 1, 8], strides = [1, 1, 1, 1]} : vector<2x4x8x10xbf16> to vector<1x4x1x8xbf16>
    %117 = vector.shape_cast %116 : vector<1x4x1x8xbf16> to vector<4x8xbf16>
    %118 = vector.extract_strided_slice %21 {offsets = [0, 0, 4, 0], sizes = [1, 4, 1, 8], strides = [1, 1, 1, 1]} : vector<2x4x8x10xbf16> to vector<1x4x1x8xbf16>
    %119 = vector.shape_cast %118 : vector<1x4x1x8xbf16> to vector<4x8xbf16>
    %120 = vector.extract_strided_slice %21 {offsets = [0, 0, 5, 0], sizes = [1, 4, 1, 8], strides = [1, 1, 1, 1]} : vector<2x4x8x10xbf16> to vector<1x4x1x8xbf16>
    %121 = vector.shape_cast %120 : vector<1x4x1x8xbf16> to vector<4x8xbf16>
    %122 = vector.extract_strided_slice %21 {offsets = [0, 0, 6, 0], sizes = [1, 4, 1, 8], strides = [1, 1, 1, 1]} : vector<2x4x8x10xbf16> to vector<1x4x1x8xbf16>
    %123 = vector.shape_cast %122 : vector<1x4x1x8xbf16> to vector<4x8xbf16>
    %124 = vector.extract_strided_slice %21 {offsets = [0, 0, 7, 0], sizes = [1, 4, 1, 8], strides = [1, 1, 1, 1]} : vector<2x4x8x10xbf16> to vector<1x4x1x8xbf16>
    %125 = vector.shape_cast %124 : vector<1x4x1x8xbf16> to vector<4x8xbf16>
    %126 = vector.extract_strided_slice %21 {offsets = [1, 0, 0, 0], sizes = [1, 4, 1, 8], strides = [1, 1, 1, 1]} : vector<2x4x8x10xbf16> to vector<1x4x1x8xbf16>
    %127 = vector.shape_cast %126 : vector<1x4x1x8xbf16> to vector<4x8xbf16>
    %128 = vector.extract_strided_slice %21 {offsets = [1, 0, 1, 0], sizes = [1, 4, 1, 8], strides = [1, 1, 1, 1]} : vector<2x4x8x10xbf16> to vector<1x4x1x8xbf16>
    %129 = vector.shape_cast %128 : vector<1x4x1x8xbf16> to vector<4x8xbf16>
    %130 = vector.extract_strided_slice %21 {offsets = [1, 0, 2, 0], sizes = [1, 4, 1, 8], strides = [1, 1, 1, 1]} : vector<2x4x8x10xbf16> to vector<1x4x1x8xbf16>
    %131 = vector.shape_cast %130 : vector<1x4x1x8xbf16> to vector<4x8xbf16>
    %132 = vector.extract_strided_slice %21 {offsets = [1, 0, 3, 0], sizes = [1, 4, 1, 8], strides = [1, 1, 1, 1]} : vector<2x4x8x10xbf16> to vector<1x4x1x8xbf16>
    %133 = vector.shape_cast %132 : vector<1x4x1x8xbf16> to vector<4x8xbf16>
    %134 = vector.extract_strided_slice %21 {offsets = [1, 0, 4, 0], sizes = [1, 4, 1, 8], strides = [1, 1, 1, 1]} : vector<2x4x8x10xbf16> to vector<1x4x1x8xbf16>
    %135 = vector.shape_cast %134 : vector<1x4x1x8xbf16> to vector<4x8xbf16>
    %136 = vector.extract_strided_slice %21 {offsets = [1, 0, 5, 0], sizes = [1, 4, 1, 8], strides = [1, 1, 1, 1]} : vector<2x4x8x10xbf16> to vector<1x4x1x8xbf16>
    %137 = vector.shape_cast %136 : vector<1x4x1x8xbf16> to vector<4x8xbf16>
    %138 = vector.extract_strided_slice %21 {offsets = [1, 0, 6, 0], sizes = [1, 4, 1, 8], strides = [1, 1, 1, 1]} : vector<2x4x8x10xbf16> to vector<1x4x1x8xbf16>
    %139 = vector.shape_cast %138 : vector<1x4x1x8xbf16> to vector<4x8xbf16>
    %140 = vector.extract_strided_slice %21 {offsets = [1, 0, 7, 0], sizes = [1, 4, 1, 8], strides = [1, 1, 1, 1]} : vector<2x4x8x10xbf16> to vector<1x4x1x8xbf16>
    %141 = vector.shape_cast %140 : vector<1x4x1x8xbf16> to vector<4x8xbf16>
    %142 = tpu.concatenate %111, %113, %115, %117, %119, %121, %123, %125, %127, %129, %131, %133, %135, %137, %139, %141 in 1 : vector<4x8xbf16>, vector<4x8xbf16>, vector<4x8xbf16>, vector<4x8xbf16>, vector<4x8xbf16>, vector<4x8xbf16>, vector<4x8xbf16>, vector<4x8xbf16>, vector<4x8xbf16>, vector<4x8xbf16>, vector<4x8xbf16>, vector<4x8xbf16>, vector<4x8xbf16>, vector<4x8xbf16>, vector<4x8xbf16>, vector<4x8xbf16> -> vector<4x128xbf16>
    %143 = vector.extract_strided_slice %21 {offsets = [0, 0, 0, 1], sizes = [1, 4, 1, 8], strides = [1, 1, 1, 1]} : vector<2x4x8x10xbf16> to vector<1x4x1x8xbf16>
    %144 = vector.shape_cast %143 : vector<1x4x1x8xbf16> to vector<4x8xbf16>
    %145 = vector.extract_strided_slice %21 {offsets = [0, 0, 1, 1], sizes = [1, 4, 1, 8], strides = [1, 1, 1, 1]} : vector<2x4x8x10xbf16> to vector<1x4x1x8xbf16>
    %146 = vector.shape_cast %145 : vector<1x4x1x8xbf16> to vector<4x8xbf16>
    %147 = vector.extract_strided_slice %21 {offsets = [0, 0, 2, 1], sizes = [1, 4, 1, 8], strides = [1, 1, 1, 1]} : vector<2x4x8x10xbf16> to vector<1x4x1x8xbf16>
    %148 = vector.shape_cast %147 : vector<1x4x1x8xbf16> to vector<4x8xbf16>
    %149 = vector.extract_strided_slice %21 {offsets = [0, 0, 3, 1], sizes = [1, 4, 1, 8], strides = [1, 1, 1, 1]} : vector<2x4x8x10xbf16> to vector<1x4x1x8xbf16>
    %150 = vector.shape_cast %149 : vector<1x4x1x8xbf16> to vector<4x8xbf16>
    %151 = vector.extract_strided_slice %21 {offsets = [0, 0, 4, 1], sizes = [1, 4, 1, 8], strides = [1, 1, 1, 1]} : vector<2x4x8x10xbf16> to vector<1x4x1x8xbf16>
    %152 = vector.shape_cast %151 : vector<1x4x1x8xbf16> to vector<4x8xbf16>
    %153 = vector.extract_strided_slice %21 {offsets = [0, 0, 5, 1], sizes = [1, 4, 1, 8], strides = [1, 1, 1, 1]} : vector<2x4x8x10xbf16> to vector<1x4x1x8xbf16>
    %154 = vector.shape_cast %153 : vector<1x4x1x8xbf16> to vector<4x8xbf16>
    %155 = vector.extract_strided_slice %21 {offsets = [0, 0, 6, 1], sizes = [1, 4, 1, 8], strides = [1, 1, 1, 1]} : vector<2x4x8x10xbf16> to vector<1x4x1x8xbf16>
    %156 = vector.shape_cast %155 : vector<1x4x1x8xbf16> to vector<4x8xbf16>
    %157 = vector.extract_strided_slice %21 {offsets = [0, 0, 7, 1], sizes = [1, 4, 1, 8], strides = [1, 1, 1, 1]} : vector<2x4x8x10xbf16> to vector<1x4x1x8xbf16>
    %158 = vector.shape_cast %157 : vector<1x4x1x8xbf16> to vector<4x8xbf16>
    %159 = vector.extract_strided_slice %21 {offsets = [1, 0, 0, 1], sizes = [1, 4, 1, 8], strides = [1, 1, 1, 1]} : vector<2x4x8x10xbf16> to vector<1x4x1x8xbf16>
    %160 = vector.shape_cast %159 : vector<1x4x1x8xbf16> to vector<4x8xbf16>
    %161 = vector.extract_strided_slice %21 {offsets = [1, 0, 1, 1], sizes = [1, 4, 1, 8], strides = [1, 1, 1, 1]} : vector<2x4x8x10xbf16> to vector<1x4x1x8xbf16>
    %162 = vector.shape_cast %161 : vector<1x4x1x8xbf16> to vector<4x8xbf16>
    %163 = vector.extract_strided_slice %21 {offsets = [1, 0, 2, 1], sizes = [1, 4, 1, 8], strides = [1, 1, 1, 1]} : vector<2x4x8x10xbf16> to vector<1x4x1x8xbf16>
    %164 = vector.shape_cast %163 : vector<1x4x1x8xbf16> to vector<4x8xbf16>
    %165 = vector.extract_strided_slice %21 {offsets = [1, 0, 3, 1], sizes = [1, 4, 1, 8], strides = [1, 1, 1, 1]} : vector<2x4x8x10xbf16> to vector<1x4x1x8xbf16>
    %166 = vector.shape_cast %165 : vector<1x4x1x8xbf16> to vector<4x8xbf16>
    %167 = vector.extract_strided_slice %21 {offsets = [1, 0, 4, 1], sizes = [1, 4, 1, 8], strides = [1, 1, 1, 1]} : vector<2x4x8x10xbf16> to vector<1x4x1x8xbf16>
    %168 = vector.shape_cast %167 : vector<1x4x1x8xbf16> to vector<4x8xbf16>
    %169 = vector.extract_strided_slice %21 {offsets = [1, 0, 5, 1], sizes = [1, 4, 1, 8], strides = [1, 1, 1, 1]} : vector<2x4x8x10xbf16> to vector<1x4x1x8xbf16>
    %170 = vector.shape_cast %169 : vector<1x4x1x8xbf16> to vector<4x8xbf16>
    %171 = vector.extract_strided_slice %21 {offsets = [1, 0, 6, 1], sizes = [1, 4, 1, 8], strides = [1, 1, 1, 1]} : vector<2x4x8x10xbf16> to vector<1x4x1x8xbf16>
    %172 = vector.shape_cast %171 : vector<1x4x1x8xbf16> to vector<4x8xbf16>
    %173 = vector.extract_strided_slice %21 {offsets = [1, 0, 7, 1], sizes = [1, 4, 1, 8], strides = [1, 1, 1, 1]} : vector<2x4x8x10xbf16> to vector<1x4x1x8xbf16>
    %174 = vector.shape_cast %173 : vector<1x4x1x8xbf16> to vector<4x8xbf16>
    %175 = tpu.concatenate %144, %146, %148, %150, %152, %154, %156, %158, %160, %162, %164, %166, %168, %170, %172, %174 in 1 : vector<4x8xbf16>, vector<4x8xbf16>, vector<4x8xbf16>, vector<4x8xbf16>, vector<4x8xbf16>, vector<4x8xbf16>, vector<4x8xbf16>, vector<4x8xbf16>, vector<4x8xbf16>, vector<4x8xbf16>, vector<4x8xbf16>, vector<4x8xbf16>, vector<4x8xbf16>, vector<4x8xbf16>, vector<4x8xbf16>, vector<4x8xbf16> -> vector<4x128xbf16>
    %176 = vector.extract_strided_slice %21 {offsets = [0, 0, 0, 2], sizes = [1, 4, 1, 8], strides = [1, 1, 1, 1]} : vector<2x4x8x10xbf16> to vector<1x4x1x8xbf16>
    %177 = vector.shape_cast %176 : vector<1x4x1x8xbf16> to vector<4x8xbf16>
    %178 = vector.extract_strided_slice %21 {offsets = [0, 0, 1, 2], sizes = [1, 4, 1, 8], strides = [1, 1, 1, 1]} : vector<2x4x8x10xbf16> to vector<1x4x1x8xbf16>
    %179 = vector.shape_cast %178 : vector<1x4x1x8xbf16> to vector<4x8xbf16>
    %180 = vector.extract_strided_slice %21 {offsets = [0, 0, 2, 2], sizes = [1, 4, 1, 8], strides = [1, 1, 1, 1]} : vector<2x4x8x10xbf16> to vector<1x4x1x8xbf16>
    %181 = vector.shape_cast %180 : vector<1x4x1x8xbf16> to vector<4x8xbf16>
    %182 = vector.extract_strided_slice %21 {offsets = [0, 0, 3, 2], sizes = [1, 4, 1, 8], strides = [1, 1, 1, 1]} : vector<2x4x8x10xbf16> to vector<1x4x1x8xbf16>
    %183 = vector.shape_cast %182 : vector<1x4x1x8xbf16> to vector<4x8xbf16>
    %184 = vector.extract_strided_slice %21 {offsets = [0, 0, 4, 2], sizes = [1, 4, 1, 8], strides = [1, 1, 1, 1]} : vector<2x4x8x10xbf16> to vector<1x4x1x8xbf16>
    %185 = vector.shape_cast %184 : vector<1x4x1x8xbf16> to vector<4x8xbf16>
    %186 = vector.extract_strided_slice %21 {offsets = [0, 0, 5, 2], sizes = [1, 4, 1, 8], strides = [1, 1, 1, 1]} : vector<2x4x8x10xbf16> to vector<1x4x1x8xbf16>
    %187 = vector.shape_cast %186 : vector<1x4x1x8xbf16> to vector<4x8xbf16>
    %188 = vector.extract_strided_slice %21 {offsets = [0, 0, 6, 2], sizes = [1, 4, 1, 8], strides = [1, 1, 1, 1]} : vector<2x4x8x10xbf16> to vector<1x4x1x8xbf16>
    %189 = vector.shape_cast %188 : vector<1x4x1x8xbf16> to vector<4x8xbf16>
    %190 = vector.extract_strided_slice %21 {offsets = [0, 0, 7, 2], sizes = [1, 4, 1, 8], strides = [1, 1, 1, 1]} : vector<2x4x8x10xbf16> to vector<1x4x1x8xbf16>
    %191 = vector.shape_cast %190 : vector<1x4x1x8xbf16> to vector<4x8xbf16>
    %192 = vector.extract_strided_slice %21 {offsets = [1, 0, 0, 2], sizes = [1, 4, 1, 8], strides = [1, 1, 1, 1]} : vector<2x4x8x10xbf16> to vector<1x4x1x8xbf16>
    %193 = vector.shape_cast %192 : vector<1x4x1x8xbf16> to vector<4x8xbf16>
    %194 = vector.extract_strided_slice %21 {offsets = [1, 0, 1, 2], sizes = [1, 4, 1, 8], strides = [1, 1, 1, 1]} : vector<2x4x8x10xbf16> to vector<1x4x1x8xbf16>
    %195 = vector.shape_cast %194 : vector<1x4x1x8xbf16> to vector<4x8xbf16>
    %196 = vector.extract_strided_slice %21 {offsets = [1, 0, 2, 2], sizes = [1, 4, 1, 8], strides = [1, 1, 1, 1]} : vector<2x4x8x10xbf16> to vector<1x4x1x8xbf16>
    %197 = vector.shape_cast %196 : vector<1x4x1x8xbf16> to vector<4x8xbf16>
    %198 = vector.extract_strided_slice %21 {offsets = [1, 0, 3, 2], sizes = [1, 4, 1, 8], strides = [1, 1, 1, 1]} : vector<2x4x8x10xbf16> to vector<1x4x1x8xbf16>
    %199 = vector.shape_cast %198 : vector<1x4x1x8xbf16> to vector<4x8xbf16>
    %200 = vector.extract_strided_slice %21 {offsets = [1, 0, 4, 2], sizes = [1, 4, 1, 8], strides = [1, 1, 1, 1]} : vector<2x4x8x10xbf16> to vector<1x4x1x8xbf16>
    %201 = vector.shape_cast %200 : vector<1x4x1x8xbf16> to vector<4x8xbf16>
    %202 = vector.extract_strided_slice %21 {offsets = [1, 0, 5, 2], sizes = [1, 4, 1, 8], strides = [1, 1, 1, 1]} : vector<2x4x8x10xbf16> to vector<1x4x1x8xbf16>
    %203 = vector.shape_cast %202 : vector<1x4x1x8xbf16> to vector<4x8xbf16>
    %204 = vector.extract_strided_slice %21 {offsets = [1, 0, 6, 2], sizes = [1, 4, 1, 8], strides = [1, 1, 1, 1]} : vector<2x4x8x10xbf16> to vector<1x4x1x8xbf16>
    %205 = vector.shape_cast %204 : vector<1x4x1x8xbf16> to vector<4x8xbf16>
    %206 = vector.extract_strided_slice %21 {offsets = [1, 0, 7, 2], sizes = [1, 4, 1, 8], strides = [1, 1, 1, 1]} : vector<2x4x8x10xbf16> to vector<1x4x1x8xbf16>
    %207 = vector.shape_cast %206 : vector<1x4x1x8xbf16> to vector<4x8xbf16>
    %208 = tpu.concatenate %177, %179, %181, %183, %185, %187, %189, %191, %193, %195, %197, %199, %201, %203, %205, %207 in 1 : vector<4x8xbf16>, vector<4x8xbf16>, vector<4x8xbf16>, vector<4x8xbf16>, vector<4x8xbf16>, vector<4x8xbf16>, vector<4x8xbf16>, vector<4x8xbf16>, vector<4x8xbf16>, vector<4x8xbf16>, vector<4x8xbf16>, vector<4x8xbf16>, vector<4x8xbf16>, vector<4x8xbf16>, vector<4x8xbf16>, vector<4x8xbf16> -> vector<4x128xbf16>
    %209 = vector.extract_strided_slice %21 {offsets = [0, 0, 1, 0], sizes = [1, 4, 1, 8], strides = [1, 1, 1, 1]} : vector<2x4x8x10xbf16> to vector<1x4x1x8xbf16>
    %210 = vector.shape_cast %209 : vector<1x4x1x8xbf16> to vector<4x8xbf16>
    %211 = vector.extract_strided_slice %21 {offsets = [0, 0, 2, 0], sizes = [1, 4, 1, 8], strides = [1, 1, 1, 1]} : vector<2x4x8x10xbf16> to vector<1x4x1x8xbf16>
    %212 = vector.shape_cast %211 : vector<1x4x1x8xbf16> to vector<4x8xbf16>
    %213 = vector.extract_strided_slice %21 {offsets = [0, 0, 3, 0], sizes = [1, 4, 1, 8], strides = [1, 1, 1, 1]} : vector<2x4x8x10xbf16> to vector<1x4x1x8xbf16>
    %214 = vector.shape_cast %213 : vector<1x4x1x8xbf16> to vector<4x8xbf16>
    %215 = vector.extract_strided_slice %21 {offsets = [0, 0, 4, 0], sizes = [1, 4, 1, 8], strides = [1, 1, 1, 1]} : vector<2x4x8x10xbf16> to vector<1x4x1x8xbf16>
    %216 = vector.shape_cast %215 : vector<1x4x1x8xbf16> to vector<4x8xbf16>
    %217 = vector.extract_strided_slice %21 {offsets = [0, 0, 5, 0], sizes = [1, 4, 1, 8], strides = [1, 1, 1, 1]} : vector<2x4x8x10xbf16> to vector<1x4x1x8xbf16>
    %218 = vector.shape_cast %217 : vector<1x4x1x8xbf16> to vector<4x8xbf16>
    %219 = vector.extract_strided_slice %21 {offsets = [0, 0, 6, 0], sizes = [1, 4, 1, 8], strides = [1, 1, 1, 1]} : vector<2x4x8x10xbf16> to vector<1x4x1x8xbf16>
    %220 = vector.shape_cast %219 : vector<1x4x1x8xbf16> to vector<4x8xbf16>
    %221 = vector.extract_strided_slice %21 {offsets = [0, 0, 7, 0], sizes = [1, 4, 1, 8], strides = [1, 1, 1, 1]} : vector<2x4x8x10xbf16> to vector<1x4x1x8xbf16>
    %222 = vector.shape_cast %221 : vector<1x4x1x8xbf16> to vector<4x8xbf16>
    %223 = vector.extract_strided_slice %21 {offsets = [1, 0, 1, 0], sizes = [1, 4, 1, 8], strides = [1, 1, 1, 1]} : vector<2x4x8x10xbf16> to vector<1x4x1x8xbf16>
    %224 = vector.shape_cast %223 : vector<1x4x1x8xbf16> to vector<4x8xbf16>
    %225 = vector.extract_strided_slice %21 {offsets = [1, 0, 2, 0], sizes = [1, 4, 1, 8], strides = [1, 1, 1, 1]} : vector<2x4x8x10xbf16> to vector<1x4x1x8xbf16>
    %226 = vector.shape_cast %225 : vector<1x4x1x8xbf16> to vector<4x8xbf16>
    %227 = vector.extract_strided_slice %21 {offsets = [1, 0, 3, 0], sizes = [1, 4, 1, 8], strides = [1, 1, 1, 1]} : vector<2x4x8x10xbf16> to vector<1x4x1x8xbf16>
    %228 = vector.shape_cast %227 : vector<1x4x1x8xbf16> to vector<4x8xbf16>
    %229 = vector.extract_strided_slice %21 {offsets = [1, 0, 4, 0], sizes = [1, 4, 1, 8], strides = [1, 1, 1, 1]} : vector<2x4x8x10xbf16> to vector<1x4x1x8xbf16>
    %230 = vector.shape_cast %229 : vector<1x4x1x8xbf16> to vector<4x8xbf16>
    %231 = vector.extract_strided_slice %21 {offsets = [1, 0, 5, 0], sizes = [1, 4, 1, 8], strides = [1, 1, 1, 1]} : vector<2x4x8x10xbf16> to vector<1x4x1x8xbf16>
    %232 = vector.shape_cast %231 : vector<1x4x1x8xbf16> to vector<4x8xbf16>
    %233 = vector.extract_strided_slice %21 {offsets = [1, 0, 6, 0], sizes = [1, 4, 1, 8], strides = [1, 1, 1, 1]} : vector<2x4x8x10xbf16> to vector<1x4x1x8xbf16>
    %234 = vector.shape_cast %233 : vector<1x4x1x8xbf16> to vector<4x8xbf16>
    %235 = vector.extract_strided_slice %21 {offsets = [1, 0, 7, 0], sizes = [1, 4, 1, 8], strides = [1, 1, 1, 1]} : vector<2x4x8x10xbf16> to vector<1x4x1x8xbf16>
    %236 = vector.shape_cast %235 : vector<1x4x1x8xbf16> to vector<4x8xbf16>
    %237 = tpu.concatenate %210, %212, %214, %216, %218, %220, %222, %22, %224, %226, %228, %230, %232, %234, %236, %22 in 1 : vector<4x8xbf16>, vector<4x8xbf16>, vector<4x8xbf16>, vector<4x8xbf16>, vector<4x8xbf16>, vector<4x8xbf16>, vector<4x8xbf16>, vector<4x8xbf16>, vector<4x8xbf16>, vector<4x8xbf16>, vector<4x8xbf16>, vector<4x8xbf16>, vector<4x8xbf16>, vector<4x8xbf16>, vector<4x8xbf16>, vector<4x8xbf16> -> vector<4x128xbf16>
    %238 = vector.extract_strided_slice %21 {offsets = [0, 0, 1, 1], sizes = [1, 4, 1, 8], strides = [1, 1, 1, 1]} : vector<2x4x8x10xbf16> to vector<1x4x1x8xbf16>
    %239 = vector.shape_cast %238 : vector<1x4x1x8xbf16> to vector<4x8xbf16>
    %240 = vector.extract_strided_slice %21 {offsets = [0, 0, 2, 1], sizes = [1, 4, 1, 8], strides = [1, 1, 1, 1]} : vector<2x4x8x10xbf16> to vector<1x4x1x8xbf16>
    %241 = vector.shape_cast %240 : vector<1x4x1x8xbf16> to vector<4x8xbf16>
    %242 = vector.extract_strided_slice %21 {offsets = [0, 0, 3, 1], sizes = [1, 4, 1, 8], strides = [1, 1, 1, 1]} : vector<2x4x8x10xbf16> to vector<1x4x1x8xbf16>
    %243 = vector.shape_cast %242 : vector<1x4x1x8xbf16> to vector<4x8xbf16>
    %244 = vector.extract_strided_slice %21 {offsets = [0, 0, 4, 1], sizes = [1, 4, 1, 8], strides = [1, 1, 1, 1]} : vector<2x4x8x10xbf16> to vector<1x4x1x8xbf16>
    %245 = vector.shape_cast %244 : vector<1x4x1x8xbf16> to vector<4x8xbf16>
    %246 = vector.extract_strided_slice %21 {offsets = [0, 0, 5, 1], sizes = [1, 4, 1, 8], strides = [1, 1, 1, 1]} : vector<2x4x8x10xbf16> to vector<1x4x1x8xbf16>
    %247 = vector.shape_cast %246 : vector<1x4x1x8xbf16> to vector<4x8xbf16>
    %248 = vector.extract_strided_slice %21 {offsets = [0, 0, 6, 1], sizes = [1, 4, 1, 8], strides = [1, 1, 1, 1]} : vector<2x4x8x10xbf16> to vector<1x4x1x8xbf16>
    %249 = vector.shape_cast %248 : vector<1x4x1x8xbf16> to vector<4x8xbf16>
    %250 = vector.extract_strided_slice %21 {offsets = [0, 0, 7, 1], sizes = [1, 4, 1, 8], strides = [1, 1, 1, 1]} : vector<2x4x8x10xbf16> to vector<1x4x1x8xbf16>
    %251 = vector.shape_cast %250 : vector<1x4x1x8xbf16> to vector<4x8xbf16>
    %252 = vector.extract_strided_slice %21 {offsets = [1, 0, 1, 1], sizes = [1, 4, 1, 8], strides = [1, 1, 1, 1]} : vector<2x4x8x10xbf16> to vector<1x4x1x8xbf16>
    %253 = vector.shape_cast %252 : vector<1x4x1x8xbf16> to vector<4x8xbf16>
    %254 = vector.extract_strided_slice %21 {offsets = [1, 0, 2, 1], sizes = [1, 4, 1, 8], strides = [1, 1, 1, 1]} : vector<2x4x8x10xbf16> to vector<1x4x1x8xbf16>
    %255 = vector.shape_cast %254 : vector<1x4x1x8xbf16> to vector<4x8xbf16>
    %256 = vector.extract_strided_slice %21 {offsets = [1, 0, 3, 1], sizes = [1, 4, 1, 8], strides = [1, 1, 1, 1]} : vector<2x4x8x10xbf16> to vector<1x4x1x8xbf16>
    %257 = vector.shape_cast %256 : vector<1x4x1x8xbf16> to vector<4x8xbf16>
    %258 = vector.extract_strided_slice %21 {offsets = [1, 0, 4, 1], sizes = [1, 4, 1, 8], strides = [1, 1, 1, 1]} : vector<2x4x8x10xbf16> to vector<1x4x1x8xbf16>
    %259 = vector.shape_cast %258 : vector<1x4x1x8xbf16> to vector<4x8xbf16>
    %260 = vector.extract_strided_slice %21 {offsets = [1, 0, 5, 1], sizes = [1, 4, 1, 8], strides = [1, 1, 1, 1]} : vector<2x4x8x10xbf16> to vector<1x4x1x8xbf16>
    %261 = vector.shape_cast %260 : vector<1x4x1x8xbf16> to vector<4x8xbf16>
    %262 = vector.extract_strided_slice %21 {offsets = [1, 0, 6, 1], sizes = [1, 4, 1, 8], strides = [1, 1, 1, 1]} : vector<2x4x8x10xbf16> to vector<1x4x1x8xbf16>
    %263 = vector.shape_cast %262 : vector<1x4x1x8xbf16> to vector<4x8xbf16>
    %264 = vector.extract_strided_slice %21 {offsets = [1, 0, 7, 1], sizes = [1, 4, 1, 8], strides = [1, 1, 1, 1]} : vector<2x4x8x10xbf16> to vector<1x4x1x8xbf16>
    %265 = vector.shape_cast %264 : vector<1x4x1x8xbf16> to vector<4x8xbf16>
    %266 = tpu.concatenate %239, %241, %243, %245, %247, %249, %251, %22, %253, %255, %257, %259, %261, %263, %265, %22 in 1 : vector<4x8xbf16>, vector<4x8xbf16>, vector<4x8xbf16>, vector<4x8xbf16>, vector<4x8xbf16>, vector<4x8xbf16>, vector<4x8xbf16>, vector<4x8xbf16>, vector<4x8xbf16>, vector<4x8xbf16>, vector<4x8xbf16>, vector<4x8xbf16>, vector<4x8xbf16>, vector<4x8xbf16>, vector<4x8xbf16>, vector<4x8xbf16> -> vector<4x128xbf16>
    %267 = vector.extract_strided_slice %21 {offsets = [0, 0, 1, 2], sizes = [1, 4, 1, 8], strides = [1, 1, 1, 1]} : vector<2x4x8x10xbf16> to vector<1x4x1x8xbf16>
    %268 = vector.shape_cast %267 : vector<1x4x1x8xbf16> to vector<4x8xbf16>
    %269 = vector.extract_strided_slice %21 {offsets = [0, 0, 2, 2], sizes = [1, 4, 1, 8], strides = [1, 1, 1, 1]} : vector<2x4x8x10xbf16> to vector<1x4x1x8xbf16>
    %270 = vector.shape_cast %269 : vector<1x4x1x8xbf16> to vector<4x8xbf16>
    %271 = vector.extract_strided_slice %21 {offsets = [0, 0, 3, 2], sizes = [1, 4, 1, 8], strides = [1, 1, 1, 1]} : vector<2x4x8x10xbf16> to vector<1x4x1x8xbf16>
    %272 = vector.shape_cast %271 : vector<1x4x1x8xbf16> to vector<4x8xbf16>
    %273 = vector.extract_strided_slice %21 {offsets = [0, 0, 4, 2], sizes = [1, 4, 1, 8], strides = [1, 1, 1, 1]} : vector<2x4x8x10xbf16> to vector<1x4x1x8xbf16>
    %274 = vector.shape_cast %273 : vector<1x4x1x8xbf16> to vector<4x8xbf16>
    %275 = vector.extract_strided_slice %21 {offsets = [0, 0, 5, 2], sizes = [1, 4, 1, 8], strides = [1, 1, 1, 1]} : vector<2x4x8x10xbf16> to vector<1x4x1x8xbf16>
    %276 = vector.shape_cast %275 : vector<1x4x1x8xbf16> to vector<4x8xbf16>
    %277 = vector.extract_strided_slice %21 {offsets = [0, 0, 6, 2], sizes = [1, 4, 1, 8], strides = [1, 1, 1, 1]} : vector<2x4x8x10xbf16> to vector<1x4x1x8xbf16>
    %278 = vector.shape_cast %277 : vector<1x4x1x8xbf16> to vector<4x8xbf16>
    %279 = vector.extract_strided_slice %21 {offsets = [0, 0, 7, 2], sizes = [1, 4, 1, 8], strides = [1, 1, 1, 1]} : vector<2x4x8x10xbf16> to vector<1x4x1x8xbf16>
    %280 = vector.shape_cast %279 : vector<1x4x1x8xbf16> to vector<4x8xbf16>
    %281 = vector.extract_strided_slice %21 {offsets = [1, 0, 1, 2], sizes = [1, 4, 1, 8], strides = [1, 1, 1, 1]} : vector<2x4x8x10xbf16> to vector<1x4x1x8xbf16>
    %282 = vector.shape_cast %281 : vector<1x4x1x8xbf16> to vector<4x8xbf16>
    %283 = vector.extract_strided_slice %21 {offsets = [1, 0, 2, 2], sizes = [1, 4, 1, 8], strides = [1, 1, 1, 1]} : vector<2x4x8x10xbf16> to vector<1x4x1x8xbf16>
    %284 = vector.shape_cast %283 : vector<1x4x1x8xbf16> to vector<4x8xbf16>
    %285 = vector.extract_strided_slice %21 {offsets = [1, 0, 3, 2], sizes = [1, 4, 1, 8], strides = [1, 1, 1, 1]} : vector<2x4x8x10xbf16> to vector<1x4x1x8xbf16>
    %286 = vector.shape_cast %285 : vector<1x4x1x8xbf16> to vector<4x8xbf16>
    %287 = vector.extract_strided_slice %21 {offsets = [1, 0, 4, 2], sizes = [1, 4, 1, 8], strides = [1, 1, 1, 1]} : vector<2x4x8x10xbf16> to vector<1x4x1x8xbf16>
    %288 = vector.shape_cast %287 : vector<1x4x1x8xbf16> to vector<4x8xbf16>
    %289 = vector.extract_strided_slice %21 {offsets = [1, 0, 5, 2], sizes = [1, 4, 1, 8], strides = [1, 1, 1, 1]} : vector<2x4x8x10xbf16> to vector<1x4x1x8xbf16>
    %290 = vector.shape_cast %289 : vector<1x4x1x8xbf16> to vector<4x8xbf16>
    %291 = vector.extract_strided_slice %21 {offsets = [1, 0, 6, 2], sizes = [1, 4, 1, 8], strides = [1, 1, 1, 1]} : vector<2x4x8x10xbf16> to vector<1x4x1x8xbf16>
    %292 = vector.shape_cast %291 : vector<1x4x1x8xbf16> to vector<4x8xbf16>
    %293 = vector.extract_strided_slice %21 {offsets = [1, 0, 7, 2], sizes = [1, 4, 1, 8], strides = [1, 1, 1, 1]} : vector<2x4x8x10xbf16> to vector<1x4x1x8xbf16>
    %294 = vector.shape_cast %293 : vector<1x4x1x8xbf16> to vector<4x8xbf16>
    %295 = tpu.concatenate %268, %270, %272, %274, %276, %278, %280, %22, %282, %284, %286, %288, %290, %292, %294, %22 in 1 : vector<4x8xbf16>, vector<4x8xbf16>, vector<4x8xbf16>, vector<4x8xbf16>, vector<4x8xbf16>, vector<4x8xbf16>, vector<4x8xbf16>, vector<4x8xbf16>, vector<4x8xbf16>, vector<4x8xbf16>, vector<4x8xbf16>, vector<4x8xbf16>, vector<4x8xbf16>, vector<4x8xbf16>, vector<4x8xbf16>, vector<4x8xbf16> -> vector<4x128xbf16>
    %296 = tpu.concatenate %51, %80, %109, %142, %175, %208, %237, %266, %295 in 0 : vector<4x128xbf16>, vector<4x128xbf16>, vector<4x128xbf16>, vector<4x128xbf16>, vector<4x128xbf16>, vector<4x128xbf16>, vector<4x128xbf16>, vector<4x128xbf16>, vector<4x128xbf16> -> vector<36x128xbf16>
    %c0_5 = arith.constant 0 : index
    %c0_6 = arith.constant 0 : index
    %297 = vector.load %arg2[%c0_5, %c0_6] : memref<8x36xbf16, #tpu.memory_space<vmem>>, vector<8x36xbf16>
    %cst_7 = arith.constant dense<0.000000e+00> : vector<8x128xf32>
    %298 = tpu.matmul %297, %296, %cst_7 {dimension_numbers = #tpu.dot_dimension_numbers<[1], [0], [0], [1], [0, 0, 1, 1], [], []>} : vector<8x36xbf16>, vector<36x128xbf16>, vector<8x128xf32> -> vector<8x128xf32>
    %cst_8 = arith.constant 0.000000e+00 : f32
    %299 = vector.broadcast %cst_8 : f32 to vector<8x128xf32>
    %300 = arith.cmpf oge, %298, %299 : vector<8x128xf32>
    %cst_9 = arith.constant 2.000000e-01 : f32
    %301 = vector.broadcast %cst_9 : f32 to vector<8x128xf32>
    %302 = arith.mulf %301, %298 : vector<8x128xf32>
    %303 = arith.select %300, %298, %302 : vector<8x128xi1>, vector<8x128xf32>
    %304 = vector.extract_strided_slice %303 {offsets = [0, 0], sizes = [8, 64], strides = [1, 1]} : vector<8x128xf32> to vector<8x64xf32>
    %c0_10 = arith.constant 0 : index
    %c0_11 = arith.constant 0 : index
    %c0_12 = arith.constant 0 : index
    %305 = vector.load %arg3[%c0_10, %c0_11, %c0_12] : memref<2x8x64xf32, #tpu.memory_space<vmem>>, vector<1x8x64xf32>
    %306 = vector.shape_cast %305 : vector<1x8x64xf32> to vector<8x64xf32>
    %307 = vector.shape_cast %304 : vector<8x64xf32> to vector<1x8x64xf32>
    tpu.vector_store %arg3[%c0_10, %c0_11, %c0_12], %307 {strides = array<i32>} : memref<2x8x64xf32, #tpu.memory_space<vmem>>, vector<1x8x64xf32>,
    %308 = vector.extract_strided_slice %303 {offsets = [0, 64], sizes = [8, 64], strides = [1, 1]} : vector<8x128xf32> to vector<8x64xf32>
    %c1 = arith.constant 1 : index
    %c0_13 = arith.constant 0 : index
    %c0_14 = arith.constant 0 : index
    %309 = vector.load %arg3[%c1, %c0_13, %c0_14] : memref<2x8x64xf32, #tpu.memory_space<vmem>>, vector<1x8x64xf32>
    %310 = vector.shape_cast %309 : vector<1x8x64xf32> to vector<8x64xf32>
    %311 = vector.shape_cast %308 : vector<8x64xf32> to vector<1x8x64xf32>
    tpu.vector_store %arg3[%c1, %c0_13, %c0_14], %311 {strides = array<i32>} : memref<2x8x64xf32, #tpu.memory_space<vmem>>, vector<1x8x64xf32>,
    return
  }
  func.func @transform_0(%arg0: i32) -> (i32, i32, i32, i32) {
    %c0_i32 = arith.constant 0 : i32
    %c0_i32_0 = arith.constant 0 : i32
    %c0_i32_1 = arith.constant 0 : i32
    %c0_i32_2 = arith.constant 0 : i32
    return %arg0, %c0_i32, %c0_i32_0, %c0_i32_1 : i32, i32, i32, i32
  }
  func.func @transform_1(%arg0: i32) -> (i32, i32) {
    %c0_i32 = arith.constant 0 : i32
    %c0_i32_0 = arith.constant 0 : i32
    %c0_i32_1 = arith.constant 0 : i32
    return %c0_i32, %c0_i32_0 : i32, i32
  }
  func.func @transform_2(%arg0: i32) -> (i32, i32, i32) {
    %c0_i32 = arith.constant 0 : i32
    %c0_i32_0 = arith.constant 0 : i32
    %c0_i32_1 = arith.constant 0 : i32
    return %arg0, %c0_i32, %c0_i32_0 : i32, i32, i32
  }
}

</mosaic_0001>

<llo_original>
// kernel: tpu_custom_call.1
$region0: #{tpu_custom_call.1}
  #allocation0 [shape = 'u32[]', space=smem, size = 0x4, offset = 0x4, fixed_abs, tag = 'smem constant byte address 0x4 - core index']
  #allocation1 [shape = 'u32[144,128]{1,0:T(1,128)}', space=vmem, size = 0x12000, scoped, tag = 'internal scratch']
  %s0 = inlined_call_operand.hbm [shape: f32[4,4,8,32], index: 0, kind: input, shape index: {}]
  %s1 = inlined_call_operand.hbm [shape: bf16[8,36], index: 1, kind: input, shape index: {}]
  %s2 = inlined_call_operand.hbm [shape: f32[4,8,64], index: 2, kind: output, shape index: {}]
  %s3 = sld [smem:[#allocation0]]
  $region49: #{tpu_custom_call.1} parent=0
    _
  %s5 = ssub.s32 1, %s3
  %s6 = scalar_select 0, %s5, %s3
  $region1: #{tpu_custom_call.1} parent=0
    #allocation2 [shape = 'u8[65536]{0}', space=vmem, size = 0x10000, scoped, tag = 'input window, operand 0']
    #allocation3 [shape = 's32[2]{0}', space=sflag, size = 0x8, scoped, tag = 'scoped memory for tpu_custom_call.1']
    #allocation4 [shape = 's32[2]{0}', space=sflag, size = 0x8, scoped, tag = 'scoped memory for tpu_custom_call.1']
    #allocation5 [shape = 'u8[2048]{0}', space=vmem, size = 0x800, scoped, tag = 'input window, operand 1, single buffered']
    #allocation6 [shape = 's32[1]{0}', space=sflag, size = 0x4, scoped, tag = 'scoped memory for tpu_custom_call.1']
    #allocation7 [shape = 'u8[16384]{0}', space=vmem, size = 0x4000, scoped, tag = 'output window, operand 0']
    %7 = vsyncpa [#allocation3], 0
    %s8 = scalar_lea.sflag [#allocation3], 1
    %9 = vsyncpa %s8, 0
    %10 = vsyncpa [#allocation6], 0
    %11 = vsyncpa [#allocation4], 0
    %s12 = scalar_lea.sflag [#allocation4], 1
    %13 = vsyncpa %s12, 0
    loop: start=0, step=1, limit=4
    $region2: #{tpu_custom_call.1} parent=1 // loop_pre_header
      _
    $region3: #{tpu_custom_call.1} parent=1 // loop_header
      %s15 = sphi 0, %s19
      %p16 = scmp.ge.s32.totalorder %s15, 4
      %s25 = sphi 0, %s27
      %s28 = sphi 0, %s25
      %s29 = sphi 0, %s28
      %s45 = sphi 0, %s29
      %s49 = sphi 0, %s49
      %s51 = sphi 0, %s49
      %s52 = sphi 0, %s51
      %s66 = sphi 0, %s52
      %s72 = sphi 0, %s74
      %s75 = sphi 0, %s72
      %s76 = sphi 0, %s75
      %s92 = sphi 0, %s76
    $region4: #{tpu_custom_call.1} parent=1 // loop_header_branch
      %18 = sbr.rel (%p16) target = $region8
    $region5: #{tpu_custom_call.1} parent=1 // loop_body
      %s20 = ssub.s32 %s15, 1
      %s21 = ssub.s32 %s15, 2
      %s22 = sadd.s32 %s15, 1
      %s23 = ssub.s32 %s15, %s22
      %p24 = scmp.eq.s32.totalorder %s23, 0
      %s26 = sadd.s32 %s25, 1
      %s27 = scalar_select %p24, %s25, %s26
      %p30 = pneg %p24
      %p31 = scmp.eq.s32.totalorder %s15, 1
      %p32 = por %p30, %p31
      %p33 = scmp.ne.s32.totalorder %s25, %s28
      %p34 = scmp.eq.s32.totalorder %s15, 0
      %p35 = por %p33, %p34
      %p36 = scmp.ne.s32.totalorder %s25, %s28
      %p37 = scmp.eq.s32.totalorder %s20, 1
      %p38 = por %p36, %p37
      %p39 = scmp.ne.s32.totalorder %s28, %s29
      %p40 = scmp.eq.s32.totalorder %s20, 0
      %p41 = por %p39, %p40
      %p42 = scmp.ne.s32.totalorder %s28, %s29
      %p43 = scmp.eq.s32.totalorder %s21, 1
      %p44 = por %p42, %p43
      %p46 = scmp.ne.s32.totalorder %s29, %s45
      %p47 = scmp.eq.s32.totalorder %s21, 0
      %p48 = por %p46, %p47
      %s50 = sadd.s32 %s49, 1
      %p53 = scmp.eq.s32.totalorder %s15, 1
      %p54 = scmp.ne.s32.totalorder %s49, %s51
      %p55 = scmp.eq.s32.totalorder %s15, 0
      %p56 = por %p54, %p55
      %p57 = scmp.ne.s32.totalorder %s49, %s51
      %p58 = scmp.eq.s32.totalorder %s20, 1
      %p59 = por %p57, %p58
      %p60 = scmp.ne.s32.totalorder %s51, %s52
      %p61 = scmp.eq.s32.totalorder %s20, 0
      %p62 = por %p60, %p61
      %p63 = scmp.ne.s32.totalorder %s51, %s52
      %p64 = scmp.eq.s32.totalorder %s21, 1
      %p65 = por %p63, %p64
      %p67 = scmp.ne.s32.totalorder %s52, %s66
      %p68 = scmp.eq.s32.totalorder %s21, 0
      %p69 = por %p67, %p68
      %s70 = ssub.s32 %s15, %s22
      %p71 = scmp.eq.s32.totalorder %s70, 0
      %s73 = sadd.s32 %s72, 1
      %s74 = scalar_select %p71, %s72, %s73
      %p77 = pneg %p71
      %p78 = scmp.eq.s32.totalorder %s15, 1
      %p79 = por %p77, %p78
      %p80 = scmp.ne.s32.totalorder %s72, %s75
      %p81 = scmp.eq.s32.totalorder %s15, 0
      %p82 = por %p80, %p81
      %p83 = scmp.ne.s32.totalorder %s72, %s75
      %p84 = scmp.eq.s32.totalorder %s20, 1
      %p85 = por %p83, %p84
      %p86 = scmp.ne.s32.totalorder %s75, %s76
      %p87 = scmp.eq.s32.totalorder %s20, 0
      %p88 = por %p86, %p87
      %p89 = scmp.ne.s32.totalorder %s75, %s76
      %p90 = scmp.eq.s32.totalorder %s21, 1
      %p91 = por %p89, %p90
      %p93 = scmp.ne.s32.totalorder %s76, %s92
      %p94 = scmp.eq.s32.totalorder %s21, 0
      %p95 = por %p93, %p94
      %p96 = scmp.le.s32.totalorder 1, %s15
      %p97 = scmp.lt.s32.totalorder %s15, 3
      %p98 = pnand %p96, %p97
      %p99 = pneg %p98
      // Predicated region
      $region9: #{tpu_custom_call.1} parent=5 // pred_check
        _
      $region10: #{tpu_custom_call.1} parent=5 // pred_check_branch
        %101 = sbr.rel (%p98) target = $region12
      $region11: #{tpu_custom_call.1} parent=5 // pred_region
        %s102 = ssub.s32 %s15, 1
        // Predicated region
        $region13: #{tpu_custom_call.1} parent=11 // pred_check
          %p103 = pneg %p62
        $region14: #{tpu_custom_call.1} parent=11 // pred_check_branch
          %105 = sbr.rel (%p103) target = $region16
        $region15: #{tpu_custom_call.1} parent=11 // pred_region
          %s107 = ssub.s32 64, 64
          %108 = vsyncadd [#allocation6], %s107
          %s110 = sshll.u32 [#allocation5], 4
          %s111 = int_to_ptr.vmem [resolvable:$true] %s110
          %113 = dma.hbm_to_vmem [thread:$0]  %s1, 64, %s111, [#allocation6]
        $region16: #{tpu_custom_call.1} parent=11 // pred_fallthru
          _
      $region12: #{tpu_custom_call.1} parent=5 // pred_fallthru
        _
      %p114 = scmp.lt.s32.totalorder %s15, 2
      // Predicated region
      $region17: #{tpu_custom_call.1} parent=5 // pred_check
        %p115 = pneg %p114
      $region18: #{tpu_custom_call.1} parent=5 // pred_check_branch
        %117 = sbr.rel (%p115) target = $region20
      $region19: #{tpu_custom_call.1} parent=5 // pred_region
        // Predicated region
        $region21: #{tpu_custom_call.1} parent=19 // pred_check
          %p118 = pneg %p35
        $region22: #{tpu_custom_call.1} parent=19 // pred_check_branch
          %120 = sbr.rel (%p118) target = $region24
        $region23: #{tpu_custom_call.1} parent=19 // pred_region
          %s121 = sand.u32 %s25, 1
          %s122 = scalar_lea.sflag [#allocation3], %s121
          %s123 = sand.u32 %s25, 1
          %s124 = smul.addr %s123, 64
          %s125 = scalar_lea.vmem [#allocation2], %s124
          %s126 = smul.u32 2, %s15
          %s128 = ssub.s32 1024, 1024
          %129 = vsyncadd %s122, %s128
          %s130 = smul.addr %s126, 4
          %s131 = smul.addr %s130, 128
          %s132 = scalar_lea.hbm %s0, %s131
          %s133 = sshll.u32 %s125, 4
          %s134 = int_to_ptr.vmem [resolvable:$true] %s133
          %139 = dma.hbm_to_vmem [thread:$0]  %s132, 1024, %s134, %s122, 128, 128, 8
        $region24: #{tpu_custom_call.1} parent=19 // pred_fallthru
          _
      $region20: #{tpu_custom_call.1} parent=5 // pred_fallthru
        _
      %p140 = scmp.le.s32.totalorder 1, %s15
      %p141 = scmp.lt.s32.totalorder %s15, 3
      %p142 = pnand %p140, %p141
      %p143 = pneg %p142
      // Predicated region
      $region25: #{tpu_custom_call.1} parent=5 // pred_check
        _
      $region26: #{tpu_custom_call.1} parent=5 // pred_check_branch
        %145 = sbr.rel (%p142) target = $region28
      $region27: #{tpu_custom_call.1} parent=5 // pred_region
        %s146 = ssub.s32 %s15, 1
        %s147 = sand.u32 %s28, 1
        %s148 = scalar_lea.sflag [#allocation3], %s147
        %s149 = sand.u32 %s28, 1
        %s150 = smul.addr %s149, 64
        %s151 = scalar_lea.vmem [#allocation2], %s150
        // Predicated region
        $region29: #{tpu_custom_call.1} parent=27 // pred_check
          %p152 = pneg %p41
        $region30: #{tpu_custom_call.1} parent=27 // pred_check_branch
          %154 = sbr.rel (%p152) target = $region32
        $region31: #{tpu_custom_call.1} parent=27 // pred_region
          %155 = dma.done %s148, 1024
        $region32: #{tpu_custom_call.1} parent=27 // pred_fallthru
          _
        // Predicated region
        $region33: #{tpu_custom_call.1} parent=27 // pred_check
          %p156 = pneg %p62
        $region34: #{tpu_custom_call.1} parent=27 // pred_check_branch
          %158 = sbr.rel (%p156) target = $region36
        $region35: #{tpu_custom_call.1} parent=27 // pred_region
          %159 = dma.done [#allocation6], 64
        $region36: #{tpu_custom_call.1} parent=27 // pred_fallthru
          _
        %s160 = sand.u32 %s28, 1
        %s161 = scalar_lea.sflag [#allocation3], %s160
        %s162 = sand.u32 %s28, 1
        %s163 = smul.addr %s162, 64
        %s164 = scalar_lea.vmem [#allocation2], %s163
        %p165 = pneg %p41
        %p166 = pneg %p38
        %p167 = pneg %p62
        %p168 = pneg %p59
        %p169 = pneg %p88
        %p170 = pneg %p85
        %s171 = sand.u32 %s75, 1
        %s172 = scalar_lea.sflag [#allocation4], %s171
        %s173 = sand.u32 %s75, 1
        %s174 = smul.addr %s173, 16
        %s175 = scalar_lea.vmem [#allocation7], %s174
        %s176 = smul.u32 2, %s20
        %s177 = smul.u32 2, %s20
        %v179 = vld [vmem:[%s151] sm:$0xff]
        %v180 = vld [vmem:[%s151 + $0x8] sm:$0xff]
        %v181 = vld [vmem:[%s151 + $0x10] sm:$0xff]
        %v182 = vld [vmem:[%s151 + $0x18] sm:$0xff]
        %v183 = vld [vmem:[%s151 + $0x20] sm:$0xff]
        %v184 = vld [vmem:[%s151 + $0x28] sm:$0xff]
        %v185 = vld [vmem:[%s151 + $0x30] sm:$0xff]
        %v186 = vld [vmem:[%s151 + $0x38] sm:$0xff]
        %v187 = vpack.c.bf16 %v179, %v179
        %v188 = vpack.c.bf16 %v180, %v180
        %v189 = vpack.c.bf16 %v181, %v181
        %v190 = vpack.c.bf16 %v182, %v182
        %v191 = vpack.c.bf16 %v183, %v183
        %v192 = vpack.c.bf16 %v184, %v184
        %v193 = vpack.c.bf16 %v185, %v185
        %v194 = vpack.c.bf16 %v186, %v186
        %203 = vrot.lane.b32.xlu0 %v187, 112
        %v204 = vpop.permute.xlu0 %203
        %205 = vrot.lane.b32.xlu0 %v188, 112
        %v206 = vpop.permute.xlu0 %205
        %207 = vrot.lane.b32.xlu0 %v189, 112
        %v208 = vpop.permute.xlu0 %207
        %209 = vrot.lane.b32.xlu0 %v190, 112
        %v210 = vpop.permute.xlu0 %209
        %211 = vrot.lane.b32.xlu0 %v191, 112
        %v212 = vpop.permute.xlu0 %211
        %213 = vrot.lane.b32.xlu0 %v192, 112
        %v214 = vpop.permute.xlu0 %213
        %215 = vrot.lane.b32.xlu0 %v193, 112
        %v216 = vpop.permute.xlu0 %215
        %217 = vrot.lane.b32.xlu0 %v194, 112
        %v218 = vpop.permute.xlu0 %217
        %v227 = vmax.bf16 %v187, %v204
        %v228 = vmax.bf16 %v188, %v206
        %v229 = vmax.bf16 %v189, %v208
        %v230 = vmax.bf16 %v190, %v210
        %v231 = vmax.bf16 %v191, %v212
        %v232 = vmax.bf16 %v192, %v214
        %v233 = vmax.bf16 %v193, %v216
        %v234 = vmax.bf16 %v194, %v218
        %243 = vrot.lane.b32.xlu0 %v227, 127
        %v244 = vpop.permute.xlu0 %243
        %245 = vrot.lane.b32.xlu0 %v228, 127
        %v246 = vpop.permute.xlu0 %245
        %247 = vrot.lane.b32.xlu0 %v229, 127
        %v248 = vpop.permute.xlu0 %247
        %249 = vrot.lane.b32.xlu0 %v230, 127
        %v250 = vpop.permute.xlu0 %249
        %251 = vrot.lane.b32.xlu0 %v231, 127
        %v252 = vpop.permute.xlu0 %251
        %253 = vrot.lane.b32.xlu0 %v232, 127
        %v254 = vpop.permute.xlu0 %253
        %255 = vrot.lane.b32.xlu0 %v233, 127
        %v256 = vpop.permute.xlu0 %255
        %257 = vrot.lane.b32.xlu0 %v234, 127
        %v258 = vpop.permute.xlu0 %257
        %v267 = vmax.bf16 %v227, %v244
        %v268 = vmax.bf16 %v228, %v246
        %v269 = vmax.bf16 %v229, %v248
        %v270 = vmax.bf16 %v230, %v250
        %v271 = vmax.bf16 %v231, %v252
        %v272 = vmax.bf16 %v232, %v254
        %v273 = vmax.bf16 %v233, %v256
        %v274 = vmax.bf16 %v234, %v258
        %v275 = vlaneseq
        %v276 = vshrl.u32 %v275, 7
        %v277 = vadd.s32 %v276, 8
        %v278 = vlaneseq
        %v279 = vand.u32 %v278, 127
        %v280 = vmul.u32 %v279, 2
        %vm281 = vcmp.eq.s32.totalorder %v276, %v280
        %vm282 = vcmp.eq.s32.totalorder %v277, %v280
        %v283 = vsel %vm281, 1, 0
        %v284 = vsel %vm282, 1, 0
        %v285 = vcvt.s32.f32 %v283
        %v286 = vcvt.s32.f32 %v284
        %v287 = vpack.c.bf16 %v286, %v285
        %v296 = vunpack.c.l.b16 %v267
        %v297 = vunpack.c.l.b16 %v268
        %v298 = vunpack.c.l.b16 %v269
        %v299 = vunpack.c.l.b16 %v270
        %v300 = vunpack.c.l.b16 %v271
        %v301 = vunpack.c.l.b16 %v272
        %v302 = vunpack.c.l.b16 %v273
        %v303 = vunpack.c.l.b16 %v274
        %v304 = vpack.c.b16 %v297, %v296
        %v305 = vpack.c.b16 %v299, %v298
        %v306 = vpack.c.b16 %v301, %v300
        %v307 = vpack.c.b16 %v303, %v302
        %vm308 = vcmask 121856
        %v310 = vsel %vm308, %v304, 0
        %v313 = vsel %vm308, %v305, 0
        %v316 = vsel %vm308, %v306, 0
        %v319 = vsel %vm308, %v307, 0
        %vm321 = vcmask 1046528
        %vm322 = vcmask 1047552
        %v323 = vsel %vm321, 4294967295, 65535
        %v324 = vsel %vm322, %v323, 0
        %v326 = vand.u32 %v287, %v324
        %328 = vmatprep.subr.bf16.mxu0 0
        %329 = vmatpush1.bf16.msra.mxu0 %v326
        %330 = vmatprep.subr.bf16.mxu0 0
        %331 = vmatpush1.bf16.msra.mxu0 0
        %332 = vmatprep.subr.bf16.mxu0 0
        %333 = vmatpush1.bf16.msra.mxu0 0
        %334 = vmatprep.subr.bf16.mxu0 0
        %335 = vmatpush1.bf16.msra.mxu0 0
        %336 = vmatprep.subr.bf16.mxu0 0
        %337 = vmatpush1.bf16.msra.mxu0 0
        %338 = vmatprep.subr.bf16.mxu0 0
        %339 = vmatpush1.bf16.msra.mxu0 0
        %340 = vmatprep.subr.bf16.mxu0 0
        %341 = vmatpush1.bf16.msra.mxu0 0
        %342 = vmatprep.subr.bf16.mxu0 0
        %343 = vmatpush1.bf16.msra.mxu0 0
        %344 = vmatprep.subr.bf16.mxu0 0
        %345 = vmatpush1.bf16.msra.mxu0 0
        %346 = vmatprep.subr.bf16.mxu0 0
        %347 = vmatpush1.bf16.msra.mxu0 0
        %348 = vmatprep.subr.bf16.mxu0 0
        %349 = vmatpush1.bf16.msra.mxu0 0
        %350 = vmatprep.subr.bf16.mxu0 0
        %351 = vmatpush1.bf16.msra.mxu0 0
        %352 = vmatprep.subr.bf16.mxu0 0
        %353 = vmatpush1.bf16.msra.mxu0 0
        %354 = vmatprep.subr.bf16.mxu0 0
        %355 = vmatpush1.bf16.msra.mxu0 0
        %356 = vmatprep.subr.bf16.mxu0 0
        %357 = vmatpush1.bf16.msra.mxu0 0
        %358 = vmatprep.subr.bf16.mxu0 0
        %359 = vmatpush1.bf16.msra.mxu0 0
        %360 = vmatprep.mubr.bf16.mxu0 0
        %361 = vmatmul.mubr.bf16.gmra.mrb[0].mxu0 %v310
        %v362 = vpop.f32.mrb[0].mxu0
        %v363 = vadd.f32 0.0, %v362
        %v364 = vpop.f32.mrb[0].mxu0
        %v365 = vpop.f32.mrb[0].mxu0
        %v366 = vadd.f32 0.0, %v365
        %v367 = vpop.f32.mrb[0].mxu0
        %368 = vmatprep.mubr.bf16.mxu0 0
        %369 = vmatmul.mubr.bf16.gmra.mrb[0].mxu0 %v313
        %v370 = vpop.f32.mrb[0].mxu0
        %v371 = vadd.f32 0.0, %v370
        %v372 = vpop.f32.mrb[0].mxu0
        %v373 = vpop.f32.mrb[0].mxu0
        %v374 = vadd.f32 0.0, %v373
        %v375 = vpop.f32.mrb[0].mxu0
        %376 = vmatprep.mubr.bf16.mxu0 0
        %377 = vmatmul.mubr.bf16.gmra.mrb[0].mxu0 %v316
        %v378 = vpop.f32.mrb[0].mxu0
        %v379 = vadd.f32 0.0, %v378
        %v380 = vpop.f32.mrb[0].mxu0
        %v381 = vpop.f32.mrb[0].mxu0
        %v382 = vadd.f32 0.0, %v381
        %v383 = vpop.f32.mrb[0].mxu0
        %384 = vmatprep.mubr.bf16.mxu0 0
        %385 = vmatmul.mubr.bf16.gmra.mrb[0].mxu0 %v319
        %v386 = vpop.f32.mrb[0].mxu0
        %v387 = vadd.f32 0.0, %v386
        %v388 = vpop.f32.mrb[0].mxu0
        %v389 = vpop.f32.mrb[0].mxu0
        %v390 = vadd.f32 0.0, %v389
        %v391 = vpop.f32.mrb[0].mxu0
        %392 = vdwg.mxu0
        %v393 = vpack.c.bf16 %v366, %v363
        %v394 = vpack.c.bf16 %v374, %v371
        %v395 = vpack.c.bf16 %v382, %v379
        %v396 = vpack.c.bf16 %v390, %v387
        %v401 = vunpack.c.l.b16 %v393
        %v402 = vunpack.c.h.b16 %v393
        %v403 = vunpack.c.l.b16 %v394
        %v404 = vunpack.c.h.b16 %v394
        %v405 = vunpack.c.l.b16 %v395
        %v406 = vunpack.c.h.b16 %v395
        %v407 = vunpack.c.l.b16 %v396
        %v408 = vunpack.c.h.b16 %v396
        %v409 = vpack.c.b16 %v401, %v401
        %v410 = vpack.c.b16 %v402, %v402
        %v411 = vpack.c.b16 %v403, %v403
        %v412 = vpack.c.b16 %v404, %v404
        %v413 = vpack.c.b16 %v405, %v405
        %v414 = vpack.c.b16 %v406, %v406
        %v415 = vpack.c.b16 %v407, %v407
        %v416 = vpack.c.b16 %v408, %v408
        %417 = vrot.lane.b32.xlu0 %v409, 1
        %v418 = vpop.permute.xlu0 %417
        %419 = vrot.lane.b32.xlu0 %v410, 1
        %v420 = vpop.permute.xlu0 %419
        %421 = vrot.lane.b32.xlu0 %v411, 1
        %v422 = vpop.permute.xlu0 %421
        %423 = vrot.lane.b32.xlu0 %v412, 1
        %v424 = vpop.permute.xlu0 %423
        %425 = vrot.lane.b32.xlu0 %v413, 1
        %v426 = vpop.permute.xlu0 %425
        %427 = vrot.lane.b32.xlu0 %v414, 1
        %v428 = vpop.permute.xlu0 %427
        %429 = vrot.lane.b32.xlu0 %v415, 1
        %v430 = vpop.permute.xlu0 %429
        %431 = vrot.lane.b32.xlu0 %v416, 1
        %v432 = vpop.permute.xlu0 %431
        %vm433 = vcmask 7168
        %v436 = vsel %vm433, 0, %v418
        %v438 = vsel %vm433, 0, %v420
        %v440 = vsel %vm433, 0, %v422
        %v442 = vsel %vm433, 0, %v424
        %v444 = vsel %vm433, 0, %v426
        %v446 = vsel %vm433, 0, %v428
        %v448 = vsel %vm433, 0, %v430
        %v450 = vsel %vm433, 0, %v432
        %vm451 = vcmask 72704
        %v452 = vsel %vm451, %v436, 0
        %v453 = vsel %vm451, %v438, 0
        %v454 = vsel %vm451, %v440, 0
        %v455 = vsel %vm451, %v442, 0
        %v456 = vsel %vm451, %v444, 0
        %v457 = vsel %vm451, %v446, 0
        %v458 = vsel %vm451, %v448, 0
        %v459 = vsel %vm451, %v450, 0
        %v464 = vunpack.c.l.b16 %v452
        %v465 = vunpack.c.l.b16 %v453
        %v466 = vunpack.c.l.b16 %v454
        %v467 = vunpack.c.l.b16 %v455
        %v468 = vrot.slane %v465, 7
        %vm469 = vcmask 1041409
        %v470 = vsel %vm469, %v468, %v464
        %v471 = vrot.slane %v466, 6
        %vm472 = vcmask 1042434
        %v473 = vsel %vm472, %v471, %v470
        %v474 = vrot.slane %v467, 5
        %vm475 = vcmask 1043459
        %v476 = vsel %vm475, %v474, %v473
        %v477 = vpack.c.b16 %v476, %v476
        %478 = vrot.lane.b32.xlu0 %v477, 8
        %v479 = vpop.permute.xlu0 %478
        %v480 = vrot.slane %v464, 1
        %v481 = vsel %vm469, %v465, %v480
        %v482 = vrot.slane %v466, 7
        %v483 = vsel %vm472, %v482, %v481
        %v484 = vrot.slane %v467, 6
        %v485 = vsel %vm475, %v484, %v483
        %v486 = vpack.c.b16 %v485, %v485
        %487 = vrot.lane.b32.xlu0 %v486, 16
        %v488 = vpop.permute.xlu0 %487
        %v489 = vrot.slane %v464, 2
        %v490 = vrot.slane %v465, 1
        %v491 = vsel %vm469, %v490, %v489
        %v492 = vsel %vm472, %v466, %v491
        %v493 = vrot.slane %v467, 7
        %v494 = vsel %vm475, %v493, %v492
        %v495 = vpack.c.b16 %v494, %v494
        %496 = vrot.lane.b32.xlu0 %v495, 24
        %v497 = vpop.permute.xlu0 %496
        %v498 = vrot.slane %v464, 3
        %v499 = vrot.slane %v465, 2
        %v500 = vsel %vm469, %v499, %v498
        %v501 = vrot.slane %v466, 1
        %v502 = vsel %vm472, %v501, %v500
        %v503 = vsel %vm475, %v467, %v502
        %v504 = vpack.c.b16 %v503, %v503
        %505 = vrot.lane.b32.xlu0 %v504, 32
        %v506 = vpop.permute.xlu0 %505
        %v507 = vrot.slane %v464, 4
        %v508 = vrot.slane %v465, 3
        %v509 = vsel %vm469, %v508, %v507
        %v510 = vrot.slane %v466, 2
        %v511 = vsel %vm472, %v510, %v509
        %v512 = vrot.slane %v467, 1
        %v513 = vsel %vm475, %v512, %v511
        %v514 = vpack.c.b16 %v513, %v513
        %515 = vrot.lane.b32.xlu0 %v514, 40
        %v516 = vpop.permute.xlu0 %515
        %v517 = vrot.slane %v464, 5
        %v518 = vrot.slane %v465, 4
        %v519 = vsel %vm469, %v518, %v517
        %v520 = vrot.slane %v466, 3
        %v521 = vsel %vm472, %v520, %v519
        %v522 = vrot.slane %v467, 2
        %v523 = vsel %vm475, %v522, %v521
        %v524 = vpack.c.b16 %v523, %v523
        %525 = vrot.lane.b32.xlu0 %v524, 48
        %v526 = vpop.permute.xlu0 %525
        %v527 = vrot.slane %v464, 6
        %v528 = vrot.slane %v465, 5
        %v529 = vsel %vm469, %v528, %v527
        %v530 = vrot.slane %v466, 4
        %v531 = vsel %vm472, %v530, %v529
        %v532 = vrot.slane %v467, 3
        %v533 = vsel %vm475, %v532, %v531
        %v534 = vpack.c.b16 %v533, %v533
        %535 = vrot.lane.b32.xlu0 %v534, 56
        %v536 = vpop.permute.xlu0 %535
        %v541 = vunpack.c.l.b16 %v456
        %v542 = vunpack.c.l.b16 %v457
        %v543 = vunpack.c.l.b16 %v458
        %v544 = vunpack.c.l.b16 %v459
        %v545 = vrot.slane %v542, 7
        %v546 = vsel %vm469, %v545, %v541
        %v547 = vrot.slane %v543, 6
        %v548 = vsel %vm472, %v547, %v546
        %v549 = vrot.slane %v544, 5
        %v550 = vsel %vm475, %v549, %v548
        %v551 = vpack.c.b16 %v550, %v550
        %552 = vrot.lane.b32.xlu0 %v551, 72
        %v553 = vpop.permute.xlu0 %552
        %v554 = vrot.slane %v541, 1
        %v555 = vsel %vm469, %v542, %v554
        %v556 = vrot.slane %v543, 7
        %v557 = vsel %vm472, %v556, %v555
        %v558 = vrot.slane %v544, 6
        %v559 = vsel %vm475, %v558, %v557
        %v560 = vpack.c.b16 %v559, %v559
        %561 = vrot.lane.b32.xlu0 %v560, 80
        %v562 = vpop.permute.xlu0 %561
        %v563 = vrot.slane %v541, 2
        %v564 = vrot.slane %v542, 1
        %v565 = vsel %vm469, %v564, %v563
        %v566 = vsel %vm472, %v543, %v565
        %v567 = vrot.slane %v544, 7
        %v568 = vsel %vm475, %v567, %v566
        %v569 = vpack.c.b16 %v568, %v568
        %570 = vrot.lane.b32.xlu0 %v569, 88
        %v571 = vpop.permute.xlu0 %570
        %v572 = vrot.slane %v541, 3
        %v573 = vrot.slane %v542, 2
        %v574 = vsel %vm469, %v573, %v572
        %v575 = vrot.slane %v543, 1
        %v576 = vsel %vm472, %v575, %v574
        %v577 = vsel %vm475, %v544, %v576
        %v578 = vpack.c.b16 %v577, %v577
        %579 = vrot.lane.b32.xlu0 %v578, 96
        %v580 = vpop.permute.xlu0 %579
        %v581 = vrot.slane %v541, 4
        %v582 = vrot.slane %v542, 3
        %v583 = vsel %vm469, %v582, %v581
        %v584 = vrot.slane %v543, 2
        %v585 = vsel %vm472, %v584, %v583
        %v586 = vrot.slane %v544, 1
        %v587 = vsel %vm475, %v586, %v585
        %v588 = vpack.c.b16 %v587, %v587
        %589 = vrot.lane.b32.xlu0 %v588, 104
        %v590 = vpop.permute.xlu0 %589
        %v591 = vrot.slane %v541, 5
        %v592 = vrot.slane %v542, 4
        %v593 = vsel %vm469, %v592, %v591
        %v594 = vrot.slane %v543, 3
        %v595 = vsel %vm472, %v594, %v593
        %v596 = vrot.slane %v544, 2
        %v597 = vsel %vm475, %v596, %v595
        %v598 = vpack.c.b16 %v597, %v597
        %599 = vrot.lane.b32.xlu0 %v598, 112
        %v600 = vpop.permute.xlu0 %599
        %v601 = vrot.slane %v541, 6
        %v602 = vrot.slane %v542, 5
        %v603 = vsel %vm469, %v602, %v601
        %v604 = vrot.slane %v543, 4
        %v605 = vsel %vm472, %v604, %v603
        %v606 = vrot.slane %v544, 3
        %v607 = vsel %vm475, %v606, %v605
        %v608 = vpack.c.b16 %v607, %v607
        %609 = vrot.lane.b32.xlu0 %v608, 120
        %v610 = vpop.permute.xlu0 %609
        %vm611 = vcmask 64512
        %v613 = vsel %vm611, 0, %v479
        %vm614 = vcmask 130048
        %v616 = vsel %vm614, %v613, %v488
        %vm617 = vcmask 195584
        %v619 = vsel %vm617, %v616, %v497
        %vm620 = vcmask 261120
        %v622 = vsel %vm620, %v619, %v506
        %vm623 = vcmask 326656
        %v625 = vsel %vm623, %v622, %v516
        %vm626 = vcmask 392192
        %v628 = vsel %vm626, %v625, %v526
        %vm629 = vcmask 457728
        %v631 = vsel %vm629, %v628, %v536
        %vm632 = vcmask 523264
        %v633 = vsel %vm632, %v631, 0
        %vm634 = vcmask 588800
        %v636 = vsel %vm634, %v633, %v553
        %vm637 = vcmask 654336
        %v639 = vsel %vm637, %v636, %v562
        %vm640 = vcmask 719872
        %v642 = vsel %vm640, %v639, %v571
        %vm643 = vcmask 785408
        %v645 = vsel %vm643, %v642, %v580
        %vm646 = vcmask 850944
        %v648 = vsel %vm646, %v645, %v590
        %vm649 = vcmask 916480
        %v651 = vsel %vm649, %v648, %v600
        %vm652 = vcmask 982016
        %v654 = vsel %vm652, %v651, %v610
        %655 = vrot.lane.b32.xlu0 %v477, 7
        %v656 = vpop.permute.xlu0 %655
        %657 = vrot.lane.b32.xlu0 %v486, 15
        %v658 = vpop.permute.xlu0 %657
        %659 = vrot.lane.b32.xlu0 %v495, 23
        %v660 = vpop.permute.xlu0 %659
        %661 = vrot.lane.b32.xlu0 %v504, 31
        %v662 = vpop.permute.xlu0 %661
        %663 = vrot.lane.b32.xlu0 %v514, 39
        %v664 = vpop.permute.xlu0 %663
        %665 = vrot.lane.b32.xlu0 %v524, 47
        %v666 = vpop.permute.xlu0 %665
        %667 = vrot.lane.b32.xlu0 %v534, 55
        %v668 = vpop.permute.xlu0 %667
        %669 = vrot.lane.b32.xlu0 %v551, 71
        %v670 = vpop.permute.xlu0 %669
        %671 = vrot.lane.b32.xlu0 %v560, 79
        %v672 = vpop.permute.xlu0 %671
        %673 = vrot.lane.b32.xlu0 %v569, 87
        %v674 = vpop.permute.xlu0 %673
        %675 = vrot.lane.b32.xlu0 %v578, 95
        %v676 = vpop.permute.xlu0 %675
        %677 = vrot.lane.b32.xlu0 %v588, 103
        %v678 = vpop.permute.xlu0 %677
        %679 = vrot.lane.b32.xlu0 %v598, 111
        %v680 = vpop.permute.xlu0 %679
        %681 = vrot.lane.b32.xlu0 %v608, 119
        %v682 = vpop.permute.xlu0 %681
        %v684 = vsel %vm611, 0, %v656
        %v686 = vsel %vm614, %v684, %v658
        %v688 = vsel %vm617, %v686, %v660
        %v690 = vsel %vm620, %v688, %v662
        %v692 = vsel %vm623, %v690, %v664
        %v694 = vsel %vm626, %v692, %v666
        %v696 = vsel %vm629, %v694, %v668
        %v697 = vsel %vm632, %v696, 0
        %v699 = vsel %vm634, %v697, %v670
        %v701 = vsel %vm637, %v699, %v672
        %v703 = vsel %vm640, %v701, %v674
        %v705 = vsel %vm643, %v703, %v676
        %v707 = vsel %vm646, %v705, %v678
        %v709 = vsel %vm649, %v707, %v680
        %v711 = vsel %vm652, %v709, %v682
        %712 = vrot.lane.b32.xlu0 %v477, 6
        %v713 = vpop.permute.xlu0 %712
        %714 = vrot.lane.b32.xlu0 %v486, 14
        %v715 = vpop.permute.xlu0 %714
        %716 = vrot.lane.b32.xlu0 %v495, 22
        %v717 = vpop.permute.xlu0 %716
        %718 = vrot.lane.b32.xlu0 %v504, 30
        %v719 = vpop.permute.xlu0 %718
        %720 = vrot.lane.b32.xlu0 %v514, 38
        %v721 = vpop.permute.xlu0 %720
        %722 = vrot.lane.b32.xlu0 %v524, 46
        %v723 = vpop.permute.xlu0 %722
        %724 = vrot.lane.b32.xlu0 %v534, 54
        %v725 = vpop.permute.xlu0 %724
        %726 = vrot.lane.b32.xlu0 %v551, 70
        %v727 = vpop.permute.xlu0 %726
        %728 = vrot.lane.b32.xlu0 %v560, 78
        %v729 = vpop.permute.xlu0 %728
        %730 = vrot.lane.b32.xlu0 %v569, 86
        %v731 = vpop.permute.xlu0 %730
        %732 = vrot.lane.b32.xlu0 %v578, 94
        %v733 = vpop.permute.xlu0 %732
        %734 = vrot.lane.b32.xlu0 %v588, 102
        %v735 = vpop.permute.xlu0 %734
        %736 = vrot.lane.b32.xlu0 %v598, 110
        %v737 = vpop.permute.xlu0 %736
        %738 = vrot.lane.b32.xlu0 %v608, 118
        %v739 = vpop.permute.xlu0 %738
        %v741 = vsel %vm611, 0, %v713
        %v743 = vsel %vm614, %v741, %v715
        %v745 = vsel %vm617, %v743, %v717
        %v747 = vsel %vm620, %v745, %v719
        %v749 = vsel %vm623, %v747, %v721
        %v751 = vsel %vm626, %v749, %v723
        %v753 = vsel %vm629, %v751, %v725
        %v754 = vsel %vm632, %v753, 0
        %v756 = vsel %vm634, %v754, %v727
        %v758 = vsel %vm637, %v756, %v729
        %v760 = vsel %vm640, %v758, %v731
        %v762 = vsel %vm643, %v760, %v733
        %v764 = vsel %vm646, %v762, %v735
        %v766 = vsel %vm649, %v764, %v737
        %v768 = vsel %vm652, %v766, %v739
        %769 = vrot.lane.b32.xlu0 %v486, 8
        %v770 = vpop.permute.xlu0 %769
        %771 = vrot.lane.b32.xlu0 %v495, 16
        %v772 = vpop.permute.xlu0 %771
        %773 = vrot.lane.b32.xlu0 %v504, 24
        %v774 = vpop.permute.xlu0 %773
        %775 = vrot.lane.b32.xlu0 %v514, 32
        %v776 = vpop.permute.xlu0 %775
        %777 = vrot.lane.b32.xlu0 %v524, 40
        %v778 = vpop.permute.xlu0 %777
        %779 = vrot.lane.b32.xlu0 %v534, 48
        %v780 = vpop.permute.xlu0 %779
        %v781 = vrot.slane %v464, 7
        %v782 = vrot.slane %v465, 6
        %v783 = vsel %vm469, %v782, %v781
        %v784 = vrot.slane %v466, 5
        %v785 = vsel %vm472, %v784, %v783
        %v786 = vrot.slane %v467, 4
        %v787 = vsel %vm475, %v786, %v785
        %v788 = vpack.c.b16 %v787, %v787
        %789 = vrot.lane.b32.xlu0 %v788, 56
        %v790 = vpop.permute.xlu0 %789
        %791 = vrot.lane.b32.xlu0 %v551, 64
        %v792 = vpop.permute.xlu0 %791
        %793 = vrot.lane.b32.xlu0 %v560, 72
        %v794 = vpop.permute.xlu0 %793
        %795 = vrot.lane.b32.xlu0 %v569, 80
        %v796 = vpop.permute.xlu0 %795
        %797 = vrot.lane.b32.xlu0 %v578, 88
        %v798 = vpop.permute.xlu0 %797
        %799 = vrot.lane.b32.xlu0 %v588, 96
        %v800 = vpop.permute.xlu0 %799
        %801 = vrot.lane.b32.xlu0 %v598, 104
        %v802 = vpop.permute.xlu0 %801
        %803 = vrot.lane.b32.xlu0 %v608, 112
        %v804 = vpop.permute.xlu0 %803
        %v805 = vrot.slane %v541, 7
        %v806 = vrot.slane %v542, 6
        %v807 = vsel %vm469, %v806, %v805
        %v808 = vrot.slane %v543, 5
        %v809 = vsel %vm472, %v808, %v807
        %v810 = vrot.slane %v544, 4
        %v811 = vsel %vm475, %v810, %v809
        %v812 = vpack.c.b16 %v811, %v811
        %813 = vrot.lane.b32.xlu0 %v812, 120
        %v814 = vpop.permute.xlu0 %813
        %v817 = vsel %vm611, %v477, %v770
        %v819 = vsel %vm614, %v817, %v772
        %v821 = vsel %vm617, %v819, %v774
        %v823 = vsel %vm620, %v821, %v776
        %v825 = vsel %vm623, %v823, %v778
        %v827 = vsel %vm626, %v825, %v780
        %v829 = vsel %vm629, %v827, %v790
        %v831 = vsel %vm632, %v829, %v792
        %v833 = vsel %vm634, %v831, %v794
        %v835 = vsel %vm637, %v833, %v796
        %v837 = vsel %vm640, %v835, %v798
        %v839 = vsel %vm643, %v837, %v800
        %v841 = vsel %vm646, %v839, %v802
        %v843 = vsel %vm649, %v841, %v804
        %v845 = vsel %vm652, %v843, %v814
        %846 = vrot.lane.b32.xlu0 %v477, 127
        %v847 = vpop.permute.xlu0 %846
        %848 = vrot.lane.b32.xlu0 %v486, 7
        %v849 = vpop.permute.xlu0 %848
        %850 = vrot.lane.b32.xlu0 %v495, 15
        %v851 = vpop.permute.xlu0 %850
        %852 = vrot.lane.b32.xlu0 %v504, 23
        %v853 = vpop.permute.xlu0 %852
        %854 = vrot.lane.b32.xlu0 %v514, 31
        %v855 = vpop.permute.xlu0 %854
        %856 = vrot.lane.b32.xlu0 %v524, 39
        %v857 = vpop.permute.xlu0 %856
        %858 = vrot.lane.b32.xlu0 %v534, 47
        %v859 = vpop.permute.xlu0 %858
        %860 = vrot.lane.b32.xlu0 %v788, 55
        %v861 = vpop.permute.xlu0 %860
        %862 = vrot.lane.b32.xlu0 %v551, 63
        %v863 = vpop.permute.xlu0 %862
        %864 = vrot.lane.b32.xlu0 %v560, 71
        %v865 = vpop.permute.xlu0 %864
        %866 = vrot.lane.b32.xlu0 %v569, 79
        %v867 = vpop.permute.xlu0 %866
        %868 = vrot.lane.b32.xlu0 %v578, 87
        %v869 = vpop.permute.xlu0 %868
        %870 = vrot.lane.b32.xlu0 %v588, 95
        %v871 = vpop.permute.xlu0 %870
        %872 = vrot.lane.b32.xlu0 %v598, 103
        %v873 = vpop.permute.xlu0 %872
        %874 = vrot.lane.b32.xlu0 %v608, 111
        %v875 = vpop.permute.xlu0 %874
        %876 = vrot.lane.b32.xlu0 %v812, 119
        %v877 = vpop.permute.xlu0 %876
        %v880 = vsel %vm611, %v847, %v849
        %v882 = vsel %vm614, %v880, %v851
        %v884 = vsel %vm617, %v882, %v853
        %v886 = vsel %vm620, %v884, %v855
        %v888 = vsel %vm623, %v886, %v857
        %v890 = vsel %vm626, %v888, %v859
        %v892 = vsel %vm629, %v890, %v861
        %v894 = vsel %vm632, %v892, %v863
        %v896 = vsel %vm634, %v894, %v865
        %v898 = vsel %vm637, %v896, %v867
        %v900 = vsel %vm640, %v898, %v869
        %v902 = vsel %vm643, %v900, %v871
        %v904 = vsel %vm646, %v902, %v873
        %v906 = vsel %vm649, %v904, %v875
        %v908 = vsel %vm652, %v906, %v877
        %909 = vrot.lane.b32.xlu0 %v477, 126
        %v910 = vpop.permute.xlu0 %909
        %911 = vrot.lane.b32.xlu0 %v486, 6
        %v912 = vpop.permute.xlu0 %911
        %913 = vrot.lane.b32.xlu0 %v495, 14
        %v914 = vpop.permute.xlu0 %913
        %915 = vrot.lane.b32.xlu0 %v504, 22
        %v916 = vpop.permute.xlu0 %915
        %917 = vrot.lane.b32.xlu0 %v514, 30
        %v918 = vpop.permute.xlu0 %917
        %919 = vrot.lane.b32.xlu0 %v524, 38
        %v920 = vpop.permute.xlu0 %919
        %921 = vrot.lane.b32.xlu0 %v534, 46
        %v922 = vpop.permute.xlu0 %921
        %923 = vrot.lane.b32.xlu0 %v788, 54
        %v924 = vpop.permute.xlu0 %923
        %925 = vrot.lane.b32.xlu0 %v551, 62
        %v926 = vpop.permute.xlu0 %925
        %927 = vrot.lane.b32.xlu0 %v560, 70
        %v928 = vpop.permute.xlu0 %927
        %929 = vrot.lane.b32.xlu0 %v569, 78
        %v930 = vpop.permute.xlu0 %929
        %931 = vrot.lane.b32.xlu0 %v578, 86
        %v932 = vpop.permute.xlu0 %931
        %933 = vrot.lane.b32.xlu0 %v588, 94
        %v934 = vpop.permute.xlu0 %933
        %935 = vrot.lane.b32.xlu0 %v598, 102
        %v936 = vpop.permute.xlu0 %935
        %937 = vrot.lane.b32.xlu0 %v608, 110
        %v938 = vpop.permute.xlu0 %937
        %939 = vrot.lane.b32.xlu0 %v812, 118
        %v940 = vpop.permute.xlu0 %939
        %v943 = vsel %vm611, %v910, %v912
        %v945 = vsel %vm614, %v943, %v914
        %v947 = vsel %vm617, %v945, %v916
        %v949 = vsel %vm620, %v947, %v918
        %v951 = vsel %vm623, %v949, %v920
        %v953 = vsel %vm626, %v951, %v922
        %v955 = vsel %vm629, %v953, %v924
        %v957 = vsel %vm632, %v955, %v926
        %v959 = vsel %vm634, %v957, %v928
        %v961 = vsel %vm637, %v959, %v930
        %v963 = vsel %vm640, %v961, %v932
        %v965 = vsel %vm643, %v963, %v934
        %v967 = vsel %vm646, %v965, %v936
        %v969 = vsel %vm649, %v967, %v938
        %v971 = vsel %vm652, %v969, %v940
        %v972 = vsel %vm472, %v468, %v464
        %v973 = vsel %vm475, %v471, %v972
        %vm974 = vcmask 1044484
        %v975 = vsel %vm974, %v474, %v973
        %v976 = vpack.c.b16 %v975, %v975
        %v977 = vsel %vm472, %v465, %v480
        %v978 = vsel %vm475, %v482, %v977
        %v979 = vsel %vm974, %v484, %v978
        %v980 = vpack.c.b16 %v979, %v979
        %981 = vrot.lane.b32.xlu0 %v980, 8
        %v982 = vpop.permute.xlu0 %981
        %v983 = vsel %vm472, %v490, %v489
        %v984 = vsel %vm475, %v466, %v983
        %v985 = vsel %vm974, %v493, %v984
        %v986 = vpack.c.b16 %v985, %v985
        %987 = vrot.lane.b32.xlu0 %v986, 16
        %v988 = vpop.permute.xlu0 %987
        %v989 = vsel %vm472, %v499, %v498
        %v990 = vsel %vm475, %v501, %v989
        %v991 = vsel %vm974, %v467, %v990
        %v992 = vpack.c.b16 %v991, %v991
        %993 = vrot.lane.b32.xlu0 %v992, 24
        %v994 = vpop.permute.xlu0 %993
        %v995 = vsel %vm472, %v508, %v507
        %v996 = vsel %vm475, %v510, %v995
        %v997 = vsel %vm974, %v512, %v996
        %v998 = vpack.c.b16 %v997, %v997
        %999 = vrot.lane.b32.xlu0 %v998, 32
        %v1000 = vpop.permute.xlu0 %999
        %v1001 = vsel %vm472, %v518, %v517
        %v1002 = vsel %vm475, %v520, %v1001
        %v1003 = vsel %vm974, %v522, %v1002
        %v1004 = vpack.c.b16 %v1003, %v1003
        %1005 = vrot.lane.b32.xlu0 %v1004, 40
        %v1006 = vpop.permute.xlu0 %1005
        %v1007 = vsel %vm472, %v528, %v527
        %v1008 = vsel %vm475, %v530, %v1007
        %v1009 = vsel %vm974, %v532, %v1008
        %v1010 = vpack.c.b16 %v1009, %v1009
        %1011 = vrot.lane.b32.xlu0 %v1010, 48
        %v1012 = vpop.permute.xlu0 %1011
        %v1013 = vsel %vm472, %v545, %v541
        %v1014 = vsel %vm475, %v547, %v1013
        %v1015 = vsel %vm974, %v549, %v1014
        %v1016 = vpack.c.b16 %v1015, %v1015
        %1017 = vrot.lane.b32.xlu0 %v1016, 64
        %v1018 = vpop.permute.xlu0 %1017
        %v1019 = vsel %vm472, %v542, %v554
        %v1020 = vsel %vm475, %v556, %v1019
        %v1021 = vsel %vm974, %v558, %v1020
        %v1022 = vpack.c.b16 %v1021, %v1021
        %1023 = vrot.lane.b32.xlu0 %v1022, 72
        %v1024 = vpop.permute.xlu0 %1023
        %v1025 = vsel %vm472, %v564, %v563
        %v1026 = vsel %vm475, %v543, %v1025
        %v1027 = vsel %vm974, %v567, %v1026
        %v1028 = vpack.c.b16 %v1027, %v1027
        %1029 = vrot.lane.b32.xlu0 %v1028, 80
        %v1030 = vpop.permute.xlu0 %1029
        %v1031 = vsel %vm472, %v573, %v572
        %v1032 = vsel %vm475, %v575, %v1031
        %v1033 = vsel %vm974, %v544, %v1032
        %v1034 = vpack.c.b16 %v1033, %v1033
        %1035 = vrot.lane.b32.xlu0 %v1034, 88
        %v1036 = vpop.permute.xlu0 %1035
        %v1037 = vsel %vm472, %v582, %v581
        %v1038 = vsel %vm475, %v584, %v1037
        %v1039 = vsel %vm974, %v586, %v1038
        %v1040 = vpack.c.b16 %v1039, %v1039
        %1041 = vrot.lane.b32.xlu0 %v1040, 96
        %v1042 = vpop.permute.xlu0 %1041
        %v1043 = vsel %vm472, %v592, %v591
        %v1044 = vsel %vm475, %v594, %v1043
        %v1045 = vsel %vm974, %v596, %v1044
        %v1046 = vpack.c.b16 %v1045, %v1045
        %1047 = vrot.lane.b32.xlu0 %v1046, 104
        %v1048 = vpop.permute.xlu0 %1047
        %v1049 = vsel %vm472, %v602, %v601
        %v1050 = vsel %vm475, %v604, %v1049
        %v1051 = vsel %vm974, %v606, %v1050
        %v1052 = vpack.c.b16 %v1051, %v1051
        %1053 = vrot.lane.b32.xlu0 %v1052, 112
        %v1054 = vpop.permute.xlu0 %1053
        %v1057 = vsel %vm611, %v976, %v982
        %v1059 = vsel %vm614, %v1057, %v988
        %v1061 = vsel %vm617, %v1059, %v994
        %v1063 = vsel %vm620, %v1061, %v1000
        %v1065 = vsel %vm623, %v1063, %v1006
        %v1067 = vsel %vm626, %v1065, %v1012
        %v1068 = vsel %vm629, %v1067, 0
        %v1070 = vsel %vm632, %v1068, %v1018
        %v1072 = vsel %vm634, %v1070, %v1024
        %v1074 = vsel %vm637, %v1072, %v1030
        %v1076 = vsel %vm640, %v1074, %v1036
        %v1078 = vsel %vm643, %v1076, %v1042
        %v1080 = vsel %vm646, %v1078, %v1048
        %v1082 = vsel %vm649, %v1080, %v1054
        %v1083 = vsel %vm652, %v1082, 0
        %1084 = vrot.lane.b32.xlu0 %v976, 127
        %v1085 = vpop.permute.xlu0 %1084
        %1086 = vrot.lane.b32.xlu0 %v980, 7
        %v1087 = vpop.permute.xlu0 %1086
        %1088 = vrot.lane.b32.xlu0 %v986, 15
        %v1089 = vpop.permute.xlu0 %1088
        %1090 = vrot.lane.b32.xlu0 %v992, 23
        %v1091 = vpop.permute.xlu0 %1090
        %1092 = vrot.lane.b32.xlu0 %v998, 31
        %v1093 = vpop.permute.xlu0 %1092
        %1094 = vrot.lane.b32.xlu0 %v1004, 39
        %v1095 = vpop.permute.xlu0 %1094
        %1096 = vrot.lane.b32.xlu0 %v1010, 47
        %v1097 = vpop.permute.xlu0 %1096
        %1098 = vrot.lane.b32.xlu0 %v1016, 63
        %v1099 = vpop.permute.xlu0 %1098
        %1100 = vrot.lane.b32.xlu0 %v1022, 71
        %v1101 = vpop.permute.xlu0 %1100
        %1102 = vrot.lane.b32.xlu0 %v1028, 79
        %v1103 = vpop.permute.xlu0 %1102
        %1104 = vrot.lane.b32.xlu0 %v1034, 87
        %v1105 = vpop.permute.xlu0 %1104
        %1106 = vrot.lane.b32.xlu0 %v1040, 95
        %v1107 = vpop.permute.xlu0 %1106
        %1108 = vrot.lane.b32.xlu0 %v1046, 103
        %v1109 = vpop.permute.xlu0 %1108
        %1110 = vrot.lane.b32.xlu0 %v1052, 111
        %v1111 = vpop.permute.xlu0 %1110
        %v1114 = vsel %vm611, %v1085, %v1087
        %v1116 = vsel %vm614, %v1114, %v1089
        %v1118 = vsel %vm617, %v1116, %v1091
        %v1120 = vsel %vm620, %v1118, %v1093
        %v1122 = vsel %vm623, %v1120, %v1095
        %v1124 = vsel %vm626, %v1122, %v1097
        %v1125 = vsel %vm629, %v1124, 0
        %v1127 = vsel %vm632, %v1125, %v1099
        %v1129 = vsel %vm634, %v1127, %v1101
        %v1131 = vsel %vm637, %v1129, %v1103
        %v1133 = vsel %vm640, %v1131, %v1105
        %v1135 = vsel %vm643, %v1133, %v1107
        %v1137 = vsel %vm646, %v1135, %v1109
        %v1139 = vsel %vm649, %v1137, %v1111
        %v1140 = vsel %vm652, %v1139, 0
        %1141 = vrot.lane.b32.xlu0 %v976, 126
        %v1142 = vpop.permute.xlu0 %1141
        %1143 = vrot.lane.b32.xlu0 %v980, 6
        %v1144 = vpop.permute.xlu0 %1143
        %1145 = vrot.lane.b32.xlu0 %v986, 14
        %v1146 = vpop.permute.xlu0 %1145
        %1147 = vrot.lane.b32.xlu0 %v992, 22
        %v1148 = vpop.permute.xlu0 %1147
        %1149 = vrot.lane.b32.xlu0 %v998, 30
        %v1150 = vpop.permute.xlu0 %1149
        %1151 = vrot.lane.b32.xlu0 %v1004, 38
        %v1152 = vpop.permute.xlu0 %1151
        %1153 = vrot.lane.b32.xlu0 %v1010, 46
        %v1154 = vpop.permute.xlu0 %1153
        %1155 = vrot.lane.b32.xlu0 %v1016, 62
        %v1156 = vpop.permute.xlu0 %1155
        %1157 = vrot.lane.b32.xlu0 %v1022, 70
        %v1158 = vpop.permute.xlu0 %1157
        %1159 = vrot.lane.b32.xlu0 %v1028, 78
        %v1160 = vpop.permute.xlu0 %1159
        %1161 = vrot.lane.b32.xlu0 %v1034, 86
        %v1162 = vpop.permute.xlu0 %1161
        %1163 = vrot.lane.b32.xlu0 %v1040, 94
        %v1164 = vpop.permute.xlu0 %1163
        %1165 = vrot.lane.b32.xlu0 %v1046, 102
        %v1166 = vpop.permute.xlu0 %1165
        %1167 = vrot.lane.b32.xlu0 %v1052, 110
        %v1168 = vpop.permute.xlu0 %1167
        %v1171 = vsel %vm611, %v1142, %v1144
        %v1173 = vsel %vm614, %v1171, %v1146
        %v1175 = vsel %vm617, %v1173, %v1148
        %v1177 = vsel %vm620, %v1175, %v1150
        %v1179 = vsel %vm623, %v1177, %v1152
        %v1181 = vsel %vm626, %v1179, %v1154
        %v1182 = vsel %vm629, %v1181, 0
        %v1184 = vsel %vm632, %v1182, %v1156
        %v1186 = vsel %vm634, %v1184, %v1158
        %v1188 = vsel %vm637, %v1186, %v1160
        %v1190 = vsel %vm640, %v1188, %v1162
        %v1192 = vsel %vm643, %v1190, %v1164
        %v1194 = vsel %vm646, %v1192, %v1166
        %v1196 = vsel %vm649, %v1194, %v1168
        %v1197 = vsel %vm652, %v1196, 0
        %v1199 = vrot.slane %v711, 6
        %v1201 = vrot.slane %v768, 4
        %v1203 = vrot.slane %v845, 2
        %v1205 = vrot.slane %v971, 6
        %v1206 = vshrl.u32 %v1083, 16
        %v1208 = vrot.slane %v1206, 4
        %v1209 = vshll.u32 %v1083, 16
        %v1211 = vrot.slane %v1209, 5
        %v1212 = vor.u32 %v1208, %v1211
        %v1213 = vshrl.u32 %v1140, 16
        %v1215 = vrot.slane %v1213, 2
        %v1216 = vshll.u32 %v1140, 16
        %v1218 = vrot.slane %v1216, 3
        %v1219 = vor.u32 %v1215, %v1218
        %v1220 = vshrl.u32 %v1197, 16
        %v1222 = vshll.u32 %v1197, 16
        %v1224 = vrot.slane %v1222, 1
        %v1225 = vor.u32 %v1220, %v1224
        %vm1226 = vcmask 1041408
        %v1228 = vsel %vm1226, %v654, %v1199
        %vm1229 = vcmask 1043456
        %v1231 = vsel %vm1229, %v1228, %v1201
        %vm1232 = vcmask 1045504
        %v1234 = vsel %vm1232, %v1231, %v1203
        %v1237 = vsel %vm1226, %v908, %v1205
        %v1239 = vsel %vm1229, %v1237, %v1212
        %v1241 = vsel %vm1232, %v1239, %v1219
        %v1243 = vld [vmem:[#allocation5] sm:$0xf]
        %vm1244 = vcmask 293888
        %v1246 = vsel %vm1244, %v1243, 0
        %v1249 = vsel %vm1226, %v1225, 0
        %1251 = vmatprep.subr.bf16.mxu0 0
        %1252 = vmatpush1.bf16.msra.mxu0 %v1234
        %1253 = vmatprep.subr.bf16.mxu0 0
        %1254 = vmatpush1.bf16.msra.mxu0 %v1241
        %1255 = vmatprep.subr.bf16.mxu0 0
        %1256 = vmatpush1.bf16.msra.mxu0 %v1249
        %1257 = vmatprep.subr.bf16.mxu0 0
        %1258 = vmatpush1.bf16.msra.mxu0 0
        %1259 = vmatprep.subr.bf16.mxu0 0
        %1260 = vmatpush1.bf16.msra.mxu0 0
        %1261 = vmatprep.subr.bf16.mxu0 0
        %1262 = vmatpush1.bf16.msra.mxu0 0
        %1263 = vmatprep.subr.bf16.mxu0 0
        %1264 = vmatpush1.bf16.msra.mxu0 0
        %1265 = vmatprep.subr.bf16.mxu0 0
        %1266 = vmatpush1.bf16.msra.mxu0 0
        %1267 = vmatprep.subr.bf16.mxu0 0
        %1268 = vmatpush1.bf16.msra.mxu0 0
        %1269 = vmatprep.subr.bf16.mxu0 0
        %1270 = vmatpush1.bf16.msra.mxu0 0
        %1271 = vmatprep.subr.bf16.mxu0 0
        %1272 = vmatpush1.bf16.msra.mxu0 0
        %1273 = vmatprep.subr.bf16.mxu0 0
        %1274 = vmatpush1.bf16.msra.mxu0 0
        %1275 = vmatprep.subr.bf16.mxu0 0
        %1276 = vmatpush1.bf16.msra.mxu0 0
        %1277 = vmatprep.subr.bf16.mxu0 0
        %1278 = vmatpush1.bf16.msra.mxu0 0
        %1279 = vmatprep.subr.bf16.mxu0 0
        %1280 = vmatpush1.bf16.msra.mxu0 0
        %1281 = vmatprep.subr.bf16.mxu0 0
        %1282 = vmatpush1.bf16.msra.mxu0 0
        %1283 = vmatprep.mubr.bf16.mxu0 0
        %1284 = vmatmul.mubr.bf16.gmra.mrb[0].mxu0 %v1246
        %v1285 = vpop.f32.mrb[0].mxu0
        %v1286 = vadd.f32 0.0, %v1285
        %v1287 = vpop.f32.mrb[0].mxu0
        %v1288 = vpop.f32.mrb[0].mxu0
        %v1289 = vpop.f32.mrb[0].mxu0
        %1290 = vdwg.mxu0
        %vm1291 = vcmp.ge.f32.partialorder %v1286, 0.0
        %v1292 = vmul.f32 %v1286, 0.2
        %v1293 = vsel %vm1291, %v1286, %v1292
        %1294 = vst.msk [vmem:[%s175] sm:$0xff] %vm632, %v1293
        %1296 = vrot.lane.b32.xlu0 %v1293, 64
        %v1297 = vpop.permute.xlu0 %1296
        %s1299 = scalar_lea.vmem %s175, 8 [#allocation7]
        %1300 = vst.msk [vmem:[%s1299] sm:$0xff] %vm632, %v1297
        %s1301 = sand.u32 %s75, 1
        %s1302 = scalar_lea.sflag [#allocation4], %s1301
        %s1303 = sand.u32 %s75, 1
        %s1304 = smul.addr %s1303, 16
        %s1305 = scalar_lea.vmem [#allocation7], %s1304
        // Predicated region
        $region37: #{tpu_custom_call.1} parent=27 // pred_check
          %p1306 = pneg %p85
        $region38: #{tpu_custom_call.1} parent=27 // pred_check_branch
          %1308 = sbr.rel (%p1306) target = $region40
        $region39: #{tpu_custom_call.1} parent=27 // pred_region
          %s1309 = smul.u32 2, %s20
          %s1311 = ssub.s32 256, 256
          %1312 = vsyncadd %s1302, %s1311
          %s1313 = smul.addr %s1309, 128
          %s1314 = scalar_lea.hbm %s2, %s1313
          %s1315 = sshll.u32 %s1305, 4
          %s1316 = int_to_ptr.vmem [resolvable:$true] %s1315
          %1321 = dma.vmem_to_hbm [thread:$0]  %s1316, 256, %s1314, %s1302, 128, 128, 8
        $region40: #{tpu_custom_call.1} parent=27 // pred_fallthru
          _
      $region28: #{tpu_custom_call.1} parent=5 // pred_fallthru
        _
      %p1322 = scmp.le.s32.totalorder 2, %s15
      // Predicated region
      $region41: #{tpu_custom_call.1} parent=5 // pred_check
        %p1323 = pneg %p1322
      $region42: #{tpu_custom_call.1} parent=5 // pred_check_branch
        %1325 = sbr.rel (%p1323) target = $region44
      $region43: #{tpu_custom_call.1} parent=5 // pred_region
        %s1326 = ssub.s32 %s15, 2
        // Predicated region
        $region45: #{tpu_custom_call.1} parent=43 // pred_check
          %p1327 = pneg %p91
        $region46: #{tpu_custom_call.1} parent=43 // pred_check_branch
          %1329 = sbr.rel (%p1327) target = $region48
        $region47: #{tpu_custom_call.1} parent=43 // pred_region
          %s1330 = sand.u32 %s76, 1
          %s1331 = scalar_lea.sflag [#allocation4], %s1330
          %s1332 = sand.u32 %s76, 1
          %s1333 = smul.addr %s1332, 16
          %s1334 = scalar_lea.vmem [#allocation7], %s1333
          %1335 = dma.done %s1331, 256
        $region48: #{tpu_custom_call.1} parent=43 // pred_fallthru
          _
      $region44: #{tpu_custom_call.1} parent=5 // pred_fallthru
        _
    $region6: #{tpu_custom_call.1} parent=1 // loop_footer
      %s19 = sadd.s32 1, %s15
    $region7: #{tpu_custom_call.1} parent=1 // loop_footer_branch
      %14 = sbr.rel target = $region3
    $region8: #{tpu_custom_call.1} parent=1 // loop_exit
      _
    %1336 = vsyncpa [#allocation3], 1
    %s1337 = scalar_lea.sflag [#allocation3], 1
    %1338 = vsyncpa %s1337, 1
    %1339 = vsyncpa [#allocation6], 1
    %1340 = vsyncpa [#allocation4], 1
    %s1341 = scalar_lea.sflag [#allocation4], 1
    %1342 = vsyncpa %s1341, 1

</llo_original>
